<compile_context>
chip_gen: v5e
topology: v5e:2x2
jax: 0.10.0
libtpu: 0.0.40
codegen_flags: <defaults>
</compile_context>

<pallas_src>
import numpy as np
import jax
import jax.numpy as jnp
from jax.experimental import pallas as pl
from jax.experimental.pallas import tpu as pltpu

SLOPE = 0.01  # nn.LeakyReLU default negative_slope


def _round_up(n, m):
    return (n + m - 1) // m * m


# ----------------------------- fused Pallas kernel --------------------------

def _make_kernel(C_in_p, C_out_p, L, K, stride, pad, L_out, Mp, dilations):
    """LeakyReLU -> ConvTranspose1d -> 3 residual branches, phase-major."""
    s, p = stride, pad
    f32, bf16 = jnp.float32, jnp.bfloat16

    def kernel(x_ref, wpre_ref, wres_ref, b_ref, o_ref):
        # x block: (1, C_in_p, Mp) bf16, zero-padded beyond L and C_in.
        x = x_ref[0].astype(f32)
        x = jnp.where(x >= 0, x, SLOPE * x)                    # LeakyReLU(0)==0

        lane_in = jax.lax.broadcasted_iota(jnp.int32, (C_in_p, Mp), 1)
        lane_out = jax.lax.broadcasted_iota(jnp.int32, (C_out_p, Mp), 1)

        def shifted(z, sig, lane):
            # out[:, m] = z[:, m - sig], zero outside [0, Mp).
            # XLU roll (idle slot) + VPU mask; no concats, no copies.
            if sig == 0:
                return z
            r = pltpu.roll(z, shift=sig % Mp, axis=1)
            if sig > 0:
                return jnp.where(lane >= sig, r, 0.0)
            return jnp.where(lane < Mp + sig, r, 0.0)

        # Per-phase in-window masks.  The "real" sequence (length L_out) lives
        # at absolute positions [p, p + L_out) of the uncropped transposed-conv
        # grid; phase r holds absolute position m*s + r at column m.
        win = []
        for r in range(s):
            lo = max(0, (p - r + s - 1) // s)
            hi = (p + L_out - 1 - r) // s
            win.append((lane_out >= lo) & (lane_out <= hi))

        def leaky(u):
            return jnp.where(u >= 0, u, SLOPE * u)

        # ---- pre: ConvTranspose1d(stride s, padding p), polyphase taps ----
        # phase r, col m: sum_q  W[:,:,q*s+r]^T @ x[:, m - q]
        H = []
        for r in range(s):
            acc = jnp.zeros((C_out_p, Mp), f32) + b_ref[0]
            for q in range(max(0, (K - r + s - 1) // s)):      # taps k=q*s+r<K
                acc = acc + jnp.dot(
                    wpre_ref[q * s + r],
                    shifted(x, q, lane_in).astype(bf16),
                    preferred_element_type=f32)
            H.append(jnp.where(win[r], acc, 0.0))

        # ---- ResidualStack: 3 x (LeakyReLU->Conv(d)->LeakyReLU->Conv(1)) ----
        def conv_same(U, ci, d):
            # 'same' conv, kernel 3, dilation d, on phase-major input U
            # (zero outside the window => exact 'same' zero padding).
            out = []
            for r in range(s):
                acc = jnp.zeros((C_out_p, Mp), f32) + b_ref[1 + ci]
                for k in range(3):
                    delta = r + (k - 1) * d
                    r_src = delta % s
                    q = (delta - r_src) // s
                    acc = acc + jnp.dot(
                        wres_ref[ci, k],
                        shifted(U[r_src], -q, lane_out).astype(bf16),
                        preferred_element_type=f32)
                out.append(jnp.where(win[r], acc, 0.0))
            return out

        for bi, d in enumerate(dilations):
            a1 = conv_same([leaky(h) for h in H], 2 * bi, d)
            a2 = conv_same([leaky(a) for a in a1], 2 * bi + 1, 1)
            H = [h + a for h, a in zip(H, a2)]

        # Lane-dense output slab: phases stacked along sublanes.
        for r in range(s):
            o_ref[0, r * C_out_p:(r + 1) * C_out_p, :] = H[r].astype(o_ref.dtype)

    return kernel


# ------------------------- one-time parameter prep --------------------------

def prepare_params(params, kernel_size, stride):
    """Hoisted weight preprocessing (per-tap matrices, channel pad, bf16)."""
    # TODO(synk): if loading trained weight_norm checkpoints, fold g/||v|| here.
    K, s = kernel_size, stride
    w_t = np.asarray(params["pre_w"], np.float32)      # (C_in, C_out, K)
    b_t = np.asarray(params["pre_b"], np.float32)      # (C_out,)
    C_in, C_out, _ = w_t.shape
    C_in_p, C_out_p = _round_up(C_in, 8), _round_up(C_out, 8)

    w_pre = np.zeros((K, C_out_p, C_in_p), np.float32)
    for k in range(K):
        w_pre[k, :C_out, :C_in] = w_t[:, :, k].T        # (C_out, C_in) per tap

    w_res = np.zeros((6, 3, C_out_p, C_out_p), np.float32)
    biases = np.zeros((7, C_out_p), np.float32)
    biases[0, :C_out] = b_t
    dilations, ci = [], 0
    for (w1, b1, d1, w2, b2) in params["branches"]:
        dilations.append(int(d1))
        for (w, b) in ((w1, b1), (w2, b2)):
            w = np.asarray(w, np.float32)                # (C_out, C_out, 3)
            for k in range(3):
                w_res[ci, k, :C_out, :C_out] = w[:, :, k]
            biases[1 + ci, :C_out] = np.asarray(b, np.float32)
            ci += 1

    return {
        "w_pre": jnp.asarray(w_pre, jnp.bfloat16),        # (K, C_out_p, C_in_p)
        "w_res": jnp.asarray(w_res, jnp.bfloat16),        # (6, 3, C_out_p, C_out_p)
        "biases": jnp.asarray(biases)[:, :, None],        # (7, C_out_p, 1) f32
        "dilations": tuple(dilations),
        "kernel_size": K, "stride": s,
        "in_channels": C_in, "out_channels": C_out,
        "C_in_p": C_in_p, "C_out_p": C_out_p,
    }


# --------------------------------- forward ----------------------------------

def residual_block_forward(x, prep):
    """x: (B, in_channels, L) float32 -> (B, out_channels, L_out)."""
    B, C_in, L = x.shape
    K, s = prep["kernel_size"], prep["stride"]
    p = s // 2
    C_out, C_in_p, C_out_p = prep["out_channels"], prep["C_in_p"], prep["C_out_p"]
    L_out = (L - 1) * s - 2 * p + K
    # Internal phase width: lane-dense multiple of 128, covers all window cols.
    Mp = _round_up(L + (K + s - 1) // s + 8, 128)

    # Pad channels to the sublane tile and length to Mp (zeros), cast to bf16.
    x_p = jnp.pad(x, ((0, 0), (0, C_in_p - C_in), (0, Mp - L))).astype(jnp.bfloat16)

    kernel = _make_kernel(C_in_p, C_out_p, L, K, s, p, L_out, Mp,
                          prep["dilations"])
    out = pl.pallas_call(
        kernel,
        out_shape=jax.ShapeDtypeStruct((B, s * C_out_p, Mp), jnp.float32),
        grid=(B,),
        in_specs=[
            pl.BlockSpec((1, C_in_p, Mp), lambda b: (b, 0, 0)),
            pl.BlockSpec(prep["w_pre"].shape, lambda b: (0, 0, 0)),
            pl.BlockSpec(prep["w_res"].shape, lambda b: (0, 0, 0, 0)),
            pl.BlockSpec(prep["biases"].shape, lambda b: (0, 0, 0)),
        ],
        out_specs=pl.BlockSpec((1, s * C_out_p, Mp), lambda b: (b, 0, 0)),
        compiler_params=pltpu.CompilerParams(dimension_semantics=("parallel",)),
    )(x_p, prep["w_pre"], prep["w_res"], prep["biases"])

    # Phase interleave + crop: cheap XLA layout plumbing on the final output.
    y = out.reshape(B, s, C_out_p, Mp).transpose(0, 2, 3, 1)
    y = y.reshape(B, C_out_p, s * Mp)
    return y[:, :C_out, p:p + L_out].astype(x.dtype)


# ------------------------------ numpy reference ------------------------------

def _np_leaky(x):
    return np.where(x >= 0, x, SLOPE * x)


def _np_convt1d(x, W, b, s, p):
    B, Ci, L = x.shape
    _, Co, K = W.shape
    Lout = (L - 1) * s - 2 * p + K
    y = np.zeros((B, Co, Lout), np.float32)
    for t in range(L):
        for k in range(K):
            l = t * s - p + k
            if 0 <= l < Lout:
                y[:, :, l] += np.einsum("bi,io->bo", x[:, :, t], W[:, :, k])
    return y + b[None, :, None]


def _np_conv1d(x, W, b, d):
    B, Ci, L = x.shape
    Co, _, K = W.shape
    p = d * (K - 1) // 2
    xp = np.pad(x, ((0, 0), (0, 0), (p, p)))
    y = np.zeros((B, Co, L), np.float32)
    for l in range(L):
        for k in range(K):
            y[:, :, l] += np.einsum("bi,oi->bo", xp[:, :, l + k * d], W[:, :, k])
    return y + b[None, :, None]


def np_forward(x, params, kernel_size, stride):
    x = np.asarray(x, np.float32)
    h = _np_convt1d(_np_leaky(x), np.asarray(params["pre_w"], np.float32),
                    np.asarray(params["pre_b"], np.float32), stride, stride // 2)
    for (w1, b1, d1, w2, b2) in params["branches"]:
        a = _np_conv1d(_np_leaky(h), np.asarray(w1, np.float32),
                       np.asarray(b1, np.float32), d1)
        h = h + _np_conv1d(_np_leaky(a), np.asarray(w2, np.float32),
                           np.asarray(b2, np.float32), 1)
    return h


def _bf16_round(a):
    return np.asarray(jnp.asarray(np.asarray(a), jnp.bfloat16), np.float32)


# ----------------------------------- main ------------------------------------

if __name__ == "__main__":
    B, C_IN, C_OUT, L = 2, 4, 4, 16
    KERNEL_SIZE, STRIDE = 4, 2

    key = jax.random.PRNGKey(0)
    keys = jax.random.split(key, 16)

    def init(k, shape, scale=0.2):
        return scale * jax.random.normal(k, shape, dtype=jnp.float32)

    params = {
        "pre_w": init(keys[0], (C_IN, C_OUT, KERNEL_SIZE)),  # ConvTranspose1d weight
        "pre_b": init(keys[1], (C_OUT,)),
        "branches": [],
    }
    dilations = (1, 3, 9)  # res_1, res_2, res_3 first-conv dilations
    ki = 2
    for d in dilations:
        w1 = init(keys[ki], (C_OUT, C_OUT, 3)); b1 = init(keys[ki + 1], (C_OUT,))
        w2 = init(keys[ki + 2], (C_OUT, C_OUT, 3)); b2 = init(keys[ki + 3], (C_OUT,))
        params["branches"].append((w1, b1, d, w2, b2))
        ki += 4

    x = jax.random.normal(keys[ki], (B, C_IN, L), dtype=jnp.float32)

    prep = prepare_params(params, KERNEL_SIZE, STRIDE)   # one-time weight prep
    out = residual_block_forward(x, prep)
    out = jax.block_until_ready(out)

    # Reference with bf16-rounded x / weights (the kernel feeds bf16 to the
    # MXU with f32 accumulation), f32 biases; loosened tolerance per review.
    params_q = {
        "pre_w": _bf16_round(params["pre_w"]),
        "pre_b": np.asarray(params["pre_b"], np.float32),
        "branches": [(_bf16_round(w1), np.asarray(b1, np.float32), d,
                      _bf16_round(w2), np.asarray(b2, np.float32))
                     for (w1, b1, d, w2, b2) in params["branches"]],
    }
    ref = np_forward(_bf16_round(x), params_q, KERNEL_SIZE, STRIDE)

    L_OUT = (L - 1) * STRIDE - 2 * (STRIDE // 2) + KERNEL_SIZE
    assert out.shape == (B, C_OUT, L_OUT)
    assert np.allclose(np.asarray(out), ref, atol=3e-2, rtol=3e-2), \
        "mismatch vs reference"

    print("KERNEL_OK")
</pallas_src>

<mosaic_0001>
module attributes {stable_mosaic.version = 11 : i64} {
  func.func @kernel(%arg0: i32, %arg1: memref<1x8x128xbf16, #tpu.memory_space<vmem>>, %arg2: memref<4x8x8xbf16, #tpu.memory_space<vmem>>, %arg3: memref<6x3x8x8xbf16, #tpu.memory_space<vmem>>, %arg4: memref<7x8x1xf32, #tpu.memory_space<vmem>>, %arg5: memref<1x16x128xf32, #tpu.memory_space<vmem>>) attributes {dimension_semantics = [#tpu.dimension_semantics<parallel>], iteration_bounds = array<i64: 2>, scalar_prefetch = 0 : i64, scratch_operands = 0 : i64, tpu.core_type = #tpu.core_type<tc>, window_params = [{transform_indices = @transform_0, window_bounds = array<i64: 1, 8, 128>}, {pipeline_mode = #tpu.pipeline_mode<synchronous>, transform_indices = @transform_1, window_bounds = array<i64: 4, 8, 8>}, {pipeline_mode = #tpu.pipeline_mode<synchronous>, transform_indices = @transform_2, window_bounds = array<i64: 6, 3, 8, 8>}, {pipeline_mode = #tpu.pipeline_mode<synchronous>, transform_indices = @transform_3, window_bounds = array<i64: 7, 8, 1>}, {transform_indices = @transform_4, window_bounds = array<i64: 1, 16, 128>}]} {
    %c0 = arith.constant 0 : index
    %c0_0 = arith.constant 0 : index
    %c0_1 = arith.constant 0 : index
    %0 = vector.load %arg1[%c0, %c0_0, %c0_1] : memref<1x8x128xbf16, #tpu.memory_space<vmem>>, vector<1x8x128xbf16>
    %1 = vector.shape_cast %0 : vector<1x8x128xbf16> to vector<8x128xbf16>
    %2 = arith.extf %1 : vector<8x128xbf16> to vector<8x128xf32>
    %cst = arith.constant 0.000000e+00 : f32
    %3 = vector.broadcast %cst : f32 to vector<8x128xf32>
    %4 = arith.cmpf oge, %2, %3 : vector<8x128xf32>
    %cst_2 = arith.constant 0.00999999977 : f32
    %5 = vector.broadcast %cst_2 : f32 to vector<8x128xf32>
    %6 = arith.mulf %5, %2 : vector<8x128xf32>
    %7 = arith.select %4, %2, %6 : vector<8x128xi1>, vector<8x128xf32>
    %8 = tpu.iota {dimensions = array<i32: 1>} : vector<8x128xi32>
    %9 = tpu.iota {dimensions = array<i32: 1>} : vector<8x128xi32>
    %c1_i32 = arith.constant 1 : i32
    %10 = vector.broadcast %c1_i32 : i32 to vector<8x128xi32>
    %11 = arith.cmpi sge, %9, %10 : vector<8x128xi32>
    %c16_i32 = arith.constant 16 : i32
    %12 = vector.broadcast %c16_i32 : i32 to vector<8x128xi32>
    %13 = arith.cmpi sle, %9, %12 : vector<8x128xi32>
    %14 = arith.andi %11, %13 : vector<8x128xi1>
    %c0_i32 = arith.constant 0 : i32
    %15 = vector.broadcast %c0_i32 : i32 to vector<8x128xi32>
    %16 = arith.cmpi sge, %9, %15 : vector<8x128xi32>
    %c15_i32 = arith.constant 15 : i32
    %17 = vector.broadcast %c15_i32 : i32 to vector<8x128xi32>
    %18 = arith.cmpi sle, %9, %17 : vector<8x128xi32>
    %19 = arith.andi %16, %18 : vector<8x128xi1>
    %cst_3 = arith.constant 0.000000e+00 : f32
    %20 = vector.broadcast %cst_3 : f32 to vector<8x128xf32>
    %c0_4 = arith.constant 0 : index
    %c0_5 = arith.constant 0 : index
    %c0_6 = arith.constant 0 : index
    %21 = vector.load %arg4[%c0_4, %c0_5, %c0_6] : memref<7x8x1xf32, #tpu.memory_space<vmem>>, vector<1x8x1xf32>
    %22 = vector.shape_cast %21 : vector<1x8x1xf32> to vector<8x1xf32>
    %23 = vector.broadcast %22 : vector<8x1xf32> to vector<8x128xf32>
    %24 = arith.addf %20, %23 : vector<8x128xf32>
    %c0_7 = arith.constant 0 : index
    %c0_8 = arith.constant 0 : index
    %c0_9 = arith.constant 0 : index
    %25 = vector.load %arg2[%c0_7, %c0_8, %c0_9] : memref<4x8x8xbf16, #tpu.memory_space<vmem>>, vector<1x8x8xbf16>
    %26 = vector.shape_cast %25 : vector<1x8x8xbf16> to vector<8x8xbf16>
    %27 = arith.truncf %7 : vector<8x128xf32> to vector<8x128xbf16>
    %cst_10 = arith.constant dense<0.000000e+00> : vector<8x128xf32>
    %28 = tpu.matmul %26, %27, %cst_10 {dimension_numbers = #tpu.dot_dimension_numbers<[1], [0], [0], [1], [0, 0, 1, 1], [], []>} : vector<8x8xbf16>, vector<8x128xbf16>, vector<8x128xf32> -> vector<8x128xf32>
    %29 = arith.addf %24, %28 : vector<8x128xf32>
    %c2 = arith.constant 2 : index
    %c0_11 = arith.constant 0 : index
    %c0_12 = arith.constant 0 : index
    %30 = vector.load %arg2[%c2, %c0_11, %c0_12] : memref<4x8x8xbf16, #tpu.memory_space<vmem>>, vector<1x8x8xbf16>
    %31 = vector.shape_cast %30 : vector<1x8x8xbf16> to vector<8x8xbf16>
    %c1_i32_13 = arith.constant 1 : i32
    %32 = tpu.dynamic_rotate %7 by %c1_i32_13 dim 1 : vector<8x128xf32>, i32 -> vector<8x128xf32>
    %c1_i32_14 = arith.constant 1 : i32
    %33 = vector.broadcast %c1_i32_14 : i32 to vector<8x128xi32>
    %34 = arith.cmpi sge, %8, %33 : vector<8x128xi32>
    %cst_15 = arith.constant 0.000000e+00 : f32
    %35 = vector.broadcast %cst_15 : f32 to vector<8x128xf32>
    %36 = arith.select %34, %32, %35 : vector<8x128xi1>, vector<8x128xf32>
    %37 = arith.truncf %36 : vector<8x128xf32> to vector<8x128xbf16>
    %cst_16 = arith.constant dense<0.000000e+00> : vector<8x128xf32>
    %38 = tpu.matmul %31, %37, %cst_16 {dimension_numbers = #tpu.dot_dimension_numbers<[1], [0], [0], [1], [0, 0, 1, 1], [], []>} : vector<8x8xbf16>, vector<8x128xbf16>, vector<8x128xf32> -> vector<8x128xf32>
    %39 = arith.addf %29, %38 : vector<8x128xf32>
    %cst_17 = arith.constant 0.000000e+00 : f32
    %40 = vector.broadcast %cst_17 : f32 to vector<8x128xf32>
    %41 = arith.select %14, %39, %40 : vector<8x128xi1>, vector<8x128xf32>
    %cst_18 = arith.constant 0.000000e+00 : f32
    %42 = vector.broadcast %cst_18 : f32 to vector<8x128xf32>
    %c0_19 = arith.constant 0 : index
    %c0_20 = arith.constant 0 : index
    %c0_21 = arith.constant 0 : index
    %43 = vector.load %arg4[%c0_19, %c0_20, %c0_21] : memref<7x8x1xf32, #tpu.memory_space<vmem>>, vector<1x8x1xf32>
    %44 = vector.shape_cast %43 : vector<1x8x1xf32> to vector<8x1xf32>
    %45 = vector.broadcast %44 : vector<8x1xf32> to vector<8x128xf32>
    %46 = arith.addf %42, %45 : vector<8x128xf32>
    %c1 = arith.constant 1 : index
    %c0_22 = arith.constant 0 : index
    %c0_23 = arith.constant 0 : index
    %47 = vector.load %arg2[%c1, %c0_22, %c0_23] : memref<4x8x8xbf16, #tpu.memory_space<vmem>>, vector<1x8x8xbf16>
    %48 = vector.shape_cast %47 : vector<1x8x8xbf16> to vector<8x8xbf16>
    %49 = arith.truncf %7 : vector<8x128xf32> to vector<8x128xbf16>
    %cst_24 = arith.constant dense<0.000000e+00> : vector<8x128xf32>
    %50 = tpu.matmul %48, %49, %cst_24 {dimension_numbers = #tpu.dot_dimension_numbers<[1], [0], [0], [1], [0, 0, 1, 1], [], []>} : vector<8x8xbf16>, vector<8x128xbf16>, vector<8x128xf32> -> vector<8x128xf32>
    %51 = arith.addf %46, %50 : vector<8x128xf32>
    %c3 = arith.constant 3 : index
    %c0_25 = arith.constant 0 : index
    %c0_26 = arith.constant 0 : index
    %52 = vector.load %arg2[%c3, %c0_25, %c0_26] : memref<4x8x8xbf16, #tpu.memory_space<vmem>>, vector<1x8x8xbf16>
    %53 = vector.shape_cast %52 : vector<1x8x8xbf16> to vector<8x8xbf16>
    %c1_i32_27 = arith.constant 1 : i32
    %54 = tpu.dynamic_rotate %7 by %c1_i32_27 dim 1 : vector<8x128xf32>, i32 -> vector<8x128xf32>
    %c1_i32_28 = arith.constant 1 : i32
    %55 = vector.broadcast %c1_i32_28 : i32 to vector<8x128xi32>
    %56 = arith.cmpi sge, %8, %55 : vector<8x128xi32>
    %cst_29 = arith.constant 0.000000e+00 : f32
    %57 = vector.broadcast %cst_29 : f32 to vector<8x128xf32>
    %58 = arith.select %56, %54, %57 : vector<8x128xi1>, vector<8x128xf32>
    %59 = arith.truncf %58 : vector<8x128xf32> to vector<8x128xbf16>
    %cst_30 = arith.constant dense<0.000000e+00> : vector<8x128xf32>
    %60 = tpu.matmul %53, %59, %cst_30 {dimension_numbers = #tpu.dot_dimension_numbers<[1], [0], [0], [1], [0, 0, 1, 1], [], []>} : vector<8x8xbf16>, vector<8x128xbf16>, vector<8x128xf32> -> vector<8x128xf32>
    %61 = arith.addf %51, %60 : vector<8x128xf32>
    %cst_31 = arith.constant 0.000000e+00 : f32
    %62 = vector.broadcast %cst_31 : f32 to vector<8x128xf32>
    %63 = arith.select %19, %61, %62 : vector<8x128xi1>, vector<8x128xf32>
    %cst_32 = arith.constant 0.000000e+00 : f32
    %64 = vector.broadcast %cst_32 : f32 to vector<8x128xf32>
    %65 = arith.cmpf oge, %41, %64 : vector<8x128xf32>
    %cst_33 = arith.constant 0.00999999977 : f32
    %66 = vector.broadcast %cst_33 : f32 to vector<8x128xf32>
    %67 = arith.mulf %66, %41 : vector<8x128xf32>
    %68 = arith.select %65, %41, %67 : vector<8x128xi1>, vector<8x128xf32>
    %cst_34 = arith.constant 0.000000e+00 : f32
    %69 = vector.broadcast %cst_34 : f32 to vector<8x128xf32>
    %70 = arith.cmpf oge, %63, %69 : vector<8x128xf32>
    %cst_35 = arith.constant 0.00999999977 : f32
    %71 = vector.broadcast %cst_35 : f32 to vector<8x128xf32>
    %72 = arith.mulf %71, %63 : vector<8x128xf32>
    %73 = arith.select %70, %63, %72 : vector<8x128xi1>, vector<8x128xf32>
    %cst_36 = arith.constant 0.000000e+00 : f32
    %74 = vector.broadcast %cst_36 : f32 to vector<8x128xf32>
    %c1_37 = arith.constant 1 : index
    %c0_38 = arith.constant 0 : index
    %c0_39 = arith.constant 0 : index
    %75 = vector.load %arg4[%c1_37, %c0_38, %c0_39] : memref<7x8x1xf32, #tpu.memory_space<vmem>>, vector<1x8x1xf32>
    %76 = vector.shape_cast %75 : vector<1x8x1xf32> to vector<8x1xf32>
    %77 = vector.broadcast %76 : vector<8x1xf32> to vector<8x128xf32>
    %78 = arith.addf %74, %77 : vector<8x128xf32>
    %c0_40 = arith.constant 0 : index
    %c0_41 = arith.constant 0 : index
    %c0_42 = arith.constant 0 : index
    %c0_43 = arith.constant 0 : index
    %79 = vector.load %arg3[%c0_40, %c0_41, %c0_42, %c0_43] : memref<6x3x8x8xbf16, #tpu.memory_space<vmem>>, vector<1x1x8x8xbf16>
    %80 = vector.shape_cast %79 : vector<1x1x8x8xbf16> to vector<8x8xbf16>
    %c1_i32_44 = arith.constant 1 : i32
    %81 = tpu.dynamic_rotate %73 by %c1_i32_44 dim 1 : vector<8x128xf32>, i32 -> vector<8x128xf32>
    %c1_i32_45 = arith.constant 1 : i32
    %82 = vector.broadcast %c1_i32_45 : i32 to vector<8x128xi32>
    %83 = arith.cmpi sge, %9, %82 : vector<8x128xi32>
    %cst_46 = arith.constant 0.000000e+00 : f32
    %84 = vector.broadcast %cst_46 : f32 to vector<8x128xf32>
    %85 = arith.select %83, %81, %84 : vector<8x128xi1>, vector<8x128xf32>
    %86 = arith.truncf %85 : vector<8x128xf32> to vector<8x128xbf16>
    %cst_47 = arith.constant dense<0.000000e+00> : vector<8x128xf32>
    %87 = tpu.matmul %80, %86, %cst_47 {dimension_numbers = #tpu.dot_dimension_numbers<[1], [0], [0], [1], [0, 0, 1, 1], [], []>} : vector<8x8xbf16>, vector<8x128xbf16>, vector<8x128xf32> -> vector<8x128xf32>
    %88 = arith.addf %78, %87 : vector<8x128xf32>
    %c0_48 = arith.constant 0 : index
    %c1_49 = arith.constant 1 : index
    %c0_50 = arith.constant 0 : index
    %c0_51 = arith.constant 0 : index
    %89 = vector.load %arg3[%c0_48, %c1_49, %c0_50, %c0_51] : memref<6x3x8x8xbf16, #tpu.memory_space<vmem>>, vector<1x1x8x8xbf16>
    %90 = vector.shape_cast %89 : vector<1x1x8x8xbf16> to vector<8x8xbf16>
    %91 = arith.truncf %68 : vector<8x128xf32> to vector<8x128xbf16>
    %cst_52 = arith.constant dense<0.000000e+00> : vector<8x128xf32>
    %92 = tpu.matmul %90, %91, %cst_52 {dimension_numbers = #tpu.dot_dimension_numbers<[1], [0], [0], [1], [0, 0, 1, 1], [], []>} : vector<8x8xbf16>, vector<8x128xbf16>, vector<8x128xf32> -> vector<8x128xf32>
    %93 = arith.addf %88, %92 : vector<8x128xf32>
    %c0_53 = arith.constant 0 : index
    %c2_54 = arith.constant 2 : index
    %c0_55 = arith.constant 0 : index
    %c0_56 = arith.constant 0 : index
    %94 = vector.load %arg3[%c0_53, %c2_54, %c0_55, %c0_56] : memref<6x3x8x8xbf16, #tpu.memory_space<vmem>>, vector<1x1x8x8xbf16>
    %95 = vector.shape_cast %94 : vector<1x1x8x8xbf16> to vector<8x8xbf16>
    %96 = arith.truncf %73 : vector<8x128xf32> to vector<8x128xbf16>
    %cst_57 = arith.constant dense<0.000000e+00> : vector<8x128xf32>
    %97 = tpu.matmul %95, %96, %cst_57 {dimension_numbers = #tpu.dot_dimension_numbers<[1], [0], [0], [1], [0, 0, 1, 1], [], []>} : vector<8x8xbf16>, vector<8x128xbf16>, vector<8x128xf32> -> vector<8x128xf32>
    %98 = arith.addf %93, %97 : vector<8x128xf32>
    %cst_58 = arith.constant 0.000000e+00 : f32
    %99 = vector.broadcast %cst_58 : f32 to vector<8x128xf32>
    %100 = arith.select %14, %98, %99 : vector<8x128xi1>, vector<8x128xf32>
    %cst_59 = arith.constant 0.000000e+00 : f32
    %101 = vector.broadcast %cst_59 : f32 to vector<8x128xf32>
    %c1_60 = arith.constant 1 : index
    %c0_61 = arith.constant 0 : index
    %c0_62 = arith.constant 0 : index
    %102 = vector.load %arg4[%c1_60, %c0_61, %c0_62] : memref<7x8x1xf32, #tpu.memory_space<vmem>>, vector<1x8x1xf32>
    %103 = vector.shape_cast %102 : vector<1x8x1xf32> to vector<8x1xf32>
    %104 = vector.broadcast %103 : vector<8x1xf32> to vector<8x128xf32>
    %105 = arith.addf %101, %104 : vector<8x128xf32>
    %c0_63 = arith.constant 0 : index
    %c0_64 = arith.constant 0 : index
    %c0_65 = arith.constant 0 : index
    %c0_66 = arith.constant 0 : index
    %106 = vector.load %arg3[%c0_63, %c0_64, %c0_65, %c0_66] : memref<6x3x8x8xbf16, #tpu.memory_space<vmem>>, vector<1x1x8x8xbf16>
    %107 = vector.shape_cast %106 : vector<1x1x8x8xbf16> to vector<8x8xbf16>
    %108 = arith.truncf %68 : vector<8x128xf32> to vector<8x128xbf16>
    %cst_67 = arith.constant dense<0.000000e+00> : vector<8x128xf32>
    %109 = tpu.matmul %107, %108, %cst_67 {dimension_numbers = #tpu.dot_dimension_numbers<[1], [0], [0], [1], [0, 0, 1, 1], [], []>} : vector<8x8xbf16>, vector<8x128xbf16>, vector<8x128xf32> -> vector<8x128xf32>
    %110 = arith.addf %105, %109 : vector<8x128xf32>
    %c0_68 = arith.constant 0 : index
    %c1_69 = arith.constant 1 : index
    %c0_70 = arith.constant 0 : index
    %c0_71 = arith.constant 0 : index
    %111 = vector.load %arg3[%c0_68, %c1_69, %c0_70, %c0_71] : memref<6x3x8x8xbf16, #tpu.memory_space<vmem>>, vector<1x1x8x8xbf16>
    %112 = vector.shape_cast %111 : vector<1x1x8x8xbf16> to vector<8x8xbf16>
    %113 = arith.truncf %73 : vector<8x128xf32> to vector<8x128xbf16>
    %cst_72 = arith.constant dense<0.000000e+00> : vector<8x128xf32>
    %114 = tpu.matmul %112, %113, %cst_72 {dimension_numbers = #tpu.dot_dimension_numbers<[1], [0], [0], [1], [0, 0, 1, 1], [], []>} : vector<8x8xbf16>, vector<8x128xbf16>, vector<8x128xf32> -> vector<8x128xf32>
    %115 = arith.addf %110, %114 : vector<8x128xf32>
    %c0_73 = arith.constant 0 : index
    %c2_74 = arith.constant 2 : index
    %c0_75 = arith.constant 0 : index
    %c0_76 = arith.constant 0 : index
    %116 = vector.load %arg3[%c0_73, %c2_74, %c0_75, %c0_76] : memref<6x3x8x8xbf16, #tpu.memory_space<vmem>>, vector<1x1x8x8xbf16>
    %117 = vector.shape_cast %116 : vector<1x1x8x8xbf16> to vector<8x8xbf16>
    %c127_i32 = arith.constant 127 : i32
    %118 = tpu.dynamic_rotate %68 by %c127_i32 dim 1 : vector<8x128xf32>, i32 -> vector<8x128xf32>
    %c127_i32_77 = arith.constant 127 : i32
    %119 = vector.broadcast %c127_i32_77 : i32 to vector<8x128xi32>
    %120 = arith.cmpi slt, %9, %119 : vector<8x128xi32>
    %cst_78 = arith.constant 0.000000e+00 : f32
    %121 = vector.broadcast %cst_78 : f32 to vector<8x128xf32>
    %122 = arith.select %120, %118, %121 : vector<8x128xi1>, vector<8x128xf32>
    %123 = arith.truncf %122 : vector<8x128xf32> to vector<8x128xbf16>
    %cst_79 = arith.constant dense<0.000000e+00> : vector<8x128xf32>
    %124 = tpu.matmul %117, %123, %cst_79 {dimension_numbers = #tpu.dot_dimension_numbers<[1], [0], [0], [1], [0, 0, 1, 1], [], []>} : vector<8x8xbf16>, vector<8x128xbf16>, vector<8x128xf32> -> vector<8x128xf32>
    %125 = arith.addf %115, %124 : vector<8x128xf32>
    %cst_80 = arith.constant 0.000000e+00 : f32
    %126 = vector.broadcast %cst_80 : f32 to vector<8x128xf32>
    %127 = arith.select %19, %125, %126 : vector<8x128xi1>, vector<8x128xf32>
    %cst_81 = arith.constant 0.000000e+00 : f32
    %128 = vector.broadcast %cst_81 : f32 to vector<8x128xf32>
    %129 = arith.cmpf oge, %100, %128 : vector<8x128xf32>
    %cst_82 = arith.constant 0.00999999977 : f32
    %130 = vector.broadcast %cst_82 : f32 to vector<8x128xf32>
    %131 = arith.mulf %130, %100 : vector<8x128xf32>
    %132 = arith.select %129, %100, %131 : vector<8x128xi1>, vector<8x128xf32>
    %cst_83 = arith.constant 0.000000e+00 : f32
    %133 = vector.broadcast %cst_83 : f32 to vector<8x128xf32>
    %134 = arith.cmpf oge, %127, %133 : vector<8x128xf32>
    %cst_84 = arith.constant 0.00999999977 : f32
    %135 = vector.broadcast %cst_84 : f32 to vector<8x128xf32>
    %136 = arith.mulf %135, %127 : vector<8x128xf32>
    %137 = arith.select %134, %127, %136 : vector<8x128xi1>, vector<8x128xf32>
    %cst_85 = arith.constant 0.000000e+00 : f32
    %138 = vector.broadcast %cst_85 : f32 to vector<8x128xf32>
    %c2_86 = arith.constant 2 : index
    %c0_87 = arith.constant 0 : index
    %c0_88 = arith.constant 0 : index
    %139 = vector.load %arg4[%c2_86, %c0_87, %c0_88] : memref<7x8x1xf32, #tpu.memory_space<vmem>>, vector<1x8x1xf32>
    %140 = vector.shape_cast %139 : vector<1x8x1xf32> to vector<8x1xf32>
    %141 = vector.broadcast %140 : vector<8x1xf32> to vector<8x128xf32>
    %142 = arith.addf %138, %141 : vector<8x128xf32>
    %c1_89 = arith.constant 1 : index
    %c0_90 = arith.constant 0 : index
    %c0_91 = arith.constant 0 : index
    %c0_92 = arith.constant 0 : index
    %143 = vector.load %arg3[%c1_89, %c0_90, %c0_91, %c0_92] : memref<6x3x8x8xbf16, #tpu.memory_space<vmem>>, vector<1x1x8x8xbf16>
    %144 = vector.shape_cast %143 : vector<1x1x8x8xbf16> to vector<8x8xbf16>
    %c1_i32_93 = arith.constant 1 : i32
    %145 = tpu.dynamic_rotate %137 by %c1_i32_93 dim 1 : vector<8x128xf32>, i32 -> vector<8x128xf32>
    %c1_i32_94 = arith.constant 1 : i32
    %146 = vector.broadcast %c1_i32_94 : i32 to vector<8x128xi32>
    %147 = arith.cmpi sge, %9, %146 : vector<8x128xi32>
    %cst_95 = arith.constant 0.000000e+00 : f32
    %148 = vector.broadcast %cst_95 : f32 to vector<8x128xf32>
    %149 = arith.select %147, %145, %148 : vector<8x128xi1>, vector<8x128xf32>
    %150 = arith.truncf %149 : vector<8x128xf32> to vector<8x128xbf16>
    %cst_96 = arith.constant dense<0.000000e+00> : vector<8x128xf32>
    %151 = tpu.matmul %144, %150, %cst_96 {dimension_numbers = #tpu.dot_dimension_numbers<[1], [0], [0], [1], [0, 0, 1, 1], [], []>} : vector<8x8xbf16>, vector<8x128xbf16>, vector<8x128xf32> -> vector<8x128xf32>
    %152 = arith.addf %142, %151 : vector<8x128xf32>
    %c1_97 = arith.constant 1 : index
    %c1_98 = arith.constant 1 : index
    %c0_99 = arith.constant 0 : index
    %c0_100 = arith.constant 0 : index
    %153 = vector.load %arg3[%c1_97, %c1_98, %c0_99, %c0_100] : memref<6x3x8x8xbf16, #tpu.memory_space<vmem>>, vector<1x1x8x8xbf16>
    %154 = vector.shape_cast %153 : vector<1x1x8x8xbf16> to vector<8x8xbf16>
    %155 = arith.truncf %132 : vector<8x128xf32> to vector<8x128xbf16>
    %cst_101 = arith.constant dense<0.000000e+00> : vector<8x128xf32>
    %156 = tpu.matmul %154, %155, %cst_101 {dimension_numbers = #tpu.dot_dimension_numbers<[1], [0], [0], [1], [0, 0, 1, 1], [], []>} : vector<8x8xbf16>, vector<8x128xbf16>, vector<8x128xf32> -> vector<8x128xf32>
    %157 = arith.addf %152, %156 : vector<8x128xf32>
    %c1_102 = arith.constant 1 : index
    %c2_103 = arith.constant 2 : index
    %c0_104 = arith.constant 0 : index
    %c0_105 = arith.constant 0 : index
    %158 = vector.load %arg3[%c1_102, %c2_103, %c0_104, %c0_105] : memref<6x3x8x8xbf16, #tpu.memory_space<vmem>>, vector<1x1x8x8xbf16>
    %159 = vector.shape_cast %158 : vector<1x1x8x8xbf16> to vector<8x8xbf16>
    %160 = arith.truncf %137 : vector<8x128xf32> to vector<8x128xbf16>
    %cst_106 = arith.constant dense<0.000000e+00> : vector<8x128xf32>
    %161 = tpu.matmul %159, %160, %cst_106 {dimension_numbers = #tpu.dot_dimension_numbers<[1], [0], [0], [1], [0, 0, 1, 1], [], []>} : vector<8x8xbf16>, vector<8x128xbf16>, vector<8x128xf32> -> vector<8x128xf32>
    %162 = arith.addf %157, %161 : vector<8x128xf32>
    %cst_107 = arith.constant 0.000000e+00 : f32
    %163 = vector.broadcast %cst_107 : f32 to vector<8x128xf32>
    %164 = arith.select %14, %162, %163 : vector<8x128xi1>, vector<8x128xf32>
    %cst_108 = arith.constant 0.000000e+00 : f32
    %165 = vector.broadcast %cst_108 : f32 to vector<8x128xf32>
    %c2_109 = arith.constant 2 : index
    %c0_110 = arith.constant 0 : index
    %c0_111 = arith.constant 0 : index
    %166 = vector.load %arg4[%c2_109, %c0_110, %c0_111] : memref<7x8x1xf32, #tpu.memory_space<vmem>>, vector<1x8x1xf32>
    %167 = vector.shape_cast %166 : vector<1x8x1xf32> to vector<8x1xf32>
    %168 = vector.broadcast %167 : vector<8x1xf32> to vector<8x128xf32>
    %169 = arith.addf %165, %168 : vector<8x128xf32>
    %c1_112 = arith.constant 1 : index
    %c0_113 = arith.constant 0 : index
    %c0_114 = arith.constant 0 : index
    %c0_115 = arith.constant 0 : index
    %170 = vector.load %arg3[%c1_112, %c0_113, %c0_114, %c0_115] : memref<6x3x8x8xbf16, #tpu.memory_space<vmem>>, vector<1x1x8x8xbf16>
    %171 = vector.shape_cast %170 : vector<1x1x8x8xbf16> to vector<8x8xbf16>
    %172 = arith.truncf %132 : vector<8x128xf32> to vector<8x128xbf16>
    %cst_116 = arith.constant dense<0.000000e+00> : vector<8x128xf32>
    %173 = tpu.matmul %171, %172, %cst_116 {dimension_numbers = #tpu.dot_dimension_numbers<[1], [0], [0], [1], [0, 0, 1, 1], [], []>} : vector<8x8xbf16>, vector<8x128xbf16>, vector<8x128xf32> -> vector<8x128xf32>
    %174 = arith.addf %169, %173 : vector<8x128xf32>
    %c1_117 = arith.constant 1 : index
    %c1_118 = arith.constant 1 : index
    %c0_119 = arith.constant 0 : index
    %c0_120 = arith.constant 0 : index
    %175 = vector.load %arg3[%c1_117, %c1_118, %c0_119, %c0_120] : memref<6x3x8x8xbf16, #tpu.memory_space<vmem>>, vector<1x1x8x8xbf16>
    %176 = vector.shape_cast %175 : vector<1x1x8x8xbf16> to vector<8x8xbf16>
    %177 = arith.truncf %137 : vector<8x128xf32> to vector<8x128xbf16>
    %cst_121 = arith.constant dense<0.000000e+00> : vector<8x128xf32>
    %178 = tpu.matmul %176, %177, %cst_121 {dimension_numbers = #tpu.dot_dimension_numbers<[1], [0], [0], [1], [0, 0, 1, 1], [], []>} : vector<8x8xbf16>, vector<8x128xbf16>, vector<8x128xf32> -> vector<8x128xf32>
    %179 = arith.addf %174, %178 : vector<8x128xf32>
    %c1_122 = arith.constant 1 : index
    %c2_123 = arith.constant 2 : index
    %c0_124 = arith.constant 0 : index
    %c0_125 = arith.constant 0 : index
    %180 = vector.load %arg3[%c1_122, %c2_123, %c0_124, %c0_125] : memref<6x3x8x8xbf16, #tpu.memory_space<vmem>>, vector<1x1x8x8xbf16>
    %181 = vector.shape_cast %180 : vector<1x1x8x8xbf16> to vector<8x8xbf16>
    %c127_i32_126 = arith.constant 127 : i32
    %182 = tpu.dynamic_rotate %132 by %c127_i32_126 dim 1 : vector<8x128xf32>, i32 -> vector<8x128xf32>
    %c127_i32_127 = arith.constant 127 : i32
    %183 = vector.broadcast %c127_i32_127 : i32 to vector<8x128xi32>
    %184 = arith.cmpi slt, %9, %183 : vector<8x128xi32>
    %cst_128 = arith.constant 0.000000e+00 : f32
    %185 = vector.broadcast %cst_128 : f32 to vector<8x128xf32>
    %186 = arith.select %184, %182, %185 : vector<8x128xi1>, vector<8x128xf32>
    %187 = arith.truncf %186 : vector<8x128xf32> to vector<8x128xbf16>
    %cst_129 = arith.constant dense<0.000000e+00> : vector<8x128xf32>
    %188 = tpu.matmul %181, %187, %cst_129 {dimension_numbers = #tpu.dot_dimension_numbers<[1], [0], [0], [1], [0, 0, 1, 1], [], []>} : vector<8x8xbf16>, vector<8x128xbf16>, vector<8x128xf32> -> vector<8x128xf32>
    %189 = arith.addf %179, %188 : vector<8x128xf32>
    %cst_130 = arith.constant 0.000000e+00 : f32
    %190 = vector.broadcast %cst_130 : f32 to vector<8x128xf32>
    %191 = arith.select %19, %189, %190 : vector<8x128xi1>, vector<8x128xf32>
    %192 = arith.addf %41, %164 : vector<8x128xf32>
    %193 = arith.addf %63, %191 : vector<8x128xf32>
    %cst_131 = arith.constant 0.000000e+00 : f32
    %194 = vector.broadcast %cst_131 : f32 to vector<8x128xf32>
    %195 = arith.cmpf oge, %192, %194 : vector<8x128xf32>
    %cst_132 = arith.constant 0.00999999977 : f32
    %196 = vector.broadcast %cst_132 : f32 to vector<8x128xf32>
    %197 = arith.mulf %196, %192 : vector<8x128xf32>
    %198 = arith.select %195, %192, %197 : vector<8x128xi1>, vector<8x128xf32>
    %cst_133 = arith.constant 0.000000e+00 : f32
    %199 = vector.broadcast %cst_133 : f32 to vector<8x128xf32>
    %200 = arith.cmpf oge, %193, %199 : vector<8x128xf32>
    %cst_134 = arith.constant 0.00999999977 : f32
    %201 = vector.broadcast %cst_134 : f32 to vector<8x128xf32>
    %202 = arith.mulf %201, %193 : vector<8x128xf32>
    %203 = arith.select %200, %193, %202 : vector<8x128xi1>, vector<8x128xf32>
    %cst_135 = arith.constant 0.000000e+00 : f32
    %204 = vector.broadcast %cst_135 : f32 to vector<8x128xf32>
    %c3_136 = arith.constant 3 : index
    %c0_137 = arith.constant 0 : index
    %c0_138 = arith.constant 0 : index
    %205 = vector.load %arg4[%c3_136, %c0_137, %c0_138] : memref<7x8x1xf32, #tpu.memory_space<vmem>>, vector<1x8x1xf32>
    %206 = vector.shape_cast %205 : vector<1x8x1xf32> to vector<8x1xf32>
    %207 = vector.broadcast %206 : vector<8x1xf32> to vector<8x128xf32>
    %208 = arith.addf %204, %207 : vector<8x128xf32>
    %c2_139 = arith.constant 2 : index
    %c0_140 = arith.constant 0 : index
    %c0_141 = arith.constant 0 : index
    %c0_142 = arith.constant 0 : index
    %209 = vector.load %arg3[%c2_139, %c0_140, %c0_141, %c0_142] : memref<6x3x8x8xbf16, #tpu.memory_space<vmem>>, vector<1x1x8x8xbf16>
    %210 = vector.shape_cast %209 : vector<1x1x8x8xbf16> to vector<8x8xbf16>
    %c2_i32 = arith.constant 2 : i32
    %211 = tpu.dynamic_rotate %203 by %c2_i32 dim 1 : vector<8x128xf32>, i32 -> vector<8x128xf32>
    %c2_i32_143 = arith.constant 2 : i32
    %212 = vector.broadcast %c2_i32_143 : i32 to vector<8x128xi32>
    %213 = arith.cmpi sge, %9, %212 : vector<8x128xi32>
    %cst_144 = arith.constant 0.000000e+00 : f32
    %214 = vector.broadcast %cst_144 : f32 to vector<8x128xf32>
    %215 = arith.select %213, %211, %214 : vector<8x128xi1>, vector<8x128xf32>
    %216 = arith.truncf %215 : vector<8x128xf32> to vector<8x128xbf16>
    %cst_145 = arith.constant dense<0.000000e+00> : vector<8x128xf32>
    %217 = tpu.matmul %210, %216, %cst_145 {dimension_numbers = #tpu.dot_dimension_numbers<[1], [0], [0], [1], [0, 0, 1, 1], [], []>} : vector<8x8xbf16>, vector<8x128xbf16>, vector<8x128xf32> -> vector<8x128xf32>
    %218 = arith.addf %208, %217 : vector<8x128xf32>
    %c2_146 = arith.constant 2 : index
    %c1_147 = arith.constant 1 : index
    %c0_148 = arith.constant 0 : index
    %c0_149 = arith.constant 0 : index
    %219 = vector.load %arg3[%c2_146, %c1_147, %c0_148, %c0_149] : memref<6x3x8x8xbf16, #tpu.memory_space<vmem>>, vector<1x1x8x8xbf16>
    %220 = vector.shape_cast %219 : vector<1x1x8x8xbf16> to vector<8x8xbf16>
    %221 = arith.truncf %198 : vector<8x128xf32> to vector<8x128xbf16>
    %cst_150 = arith.constant dense<0.000000e+00> : vector<8x128xf32>
    %222 = tpu.matmul %220, %221, %cst_150 {dimension_numbers = #tpu.dot_dimension_numbers<[1], [0], [0], [1], [0, 0, 1, 1], [], []>} : vector<8x8xbf16>, vector<8x128xbf16>, vector<8x128xf32> -> vector<8x128xf32>
    %223 = arith.addf %218, %222 : vector<8x128xf32>
    %c2_151 = arith.constant 2 : index
    %c2_152 = arith.constant 2 : index
    %c0_153 = arith.constant 0 : index
    %c0_154 = arith.constant 0 : index
    %224 = vector.load %arg3[%c2_151, %c2_152, %c0_153, %c0_154] : memref<6x3x8x8xbf16, #tpu.memory_space<vmem>>, vector<1x1x8x8xbf16>
    %225 = vector.shape_cast %224 : vector<1x1x8x8xbf16> to vector<8x8xbf16>
    %c127_i32_155 = arith.constant 127 : i32
    %226 = tpu.dynamic_rotate %203 by %c127_i32_155 dim 1 : vector<8x128xf32>, i32 -> vector<8x128xf32>
    %c127_i32_156 = arith.constant 127 : i32
    %227 = vector.broadcast %c127_i32_156 : i32 to vector<8x128xi32>
    %228 = arith.cmpi slt, %9, %227 : vector<8x128xi32>
    %cst_157 = arith.constant 0.000000e+00 : f32
    %229 = vector.broadcast %cst_157 : f32 to vector<8x128xf32>
    %230 = arith.select %228, %226, %229 : vector<8x128xi1>, vector<8x128xf32>
    %231 = arith.truncf %230 : vector<8x128xf32> to vector<8x128xbf16>
    %cst_158 = arith.constant dense<0.000000e+00> : vector<8x128xf32>
    %232 = tpu.matmul %225, %231, %cst_158 {dimension_numbers = #tpu.dot_dimension_numbers<[1], [0], [0], [1], [0, 0, 1, 1], [], []>} : vector<8x8xbf16>, vector<8x128xbf16>, vector<8x128xf32> -> vector<8x128xf32>
    %233 = arith.addf %223, %232 : vector<8x128xf32>
    %cst_159 = arith.constant 0.000000e+00 : f32
    %234 = vector.broadcast %cst_159 : f32 to vector<8x128xf32>
    %235 = arith.select %14, %233, %234 : vector<8x128xi1>, vector<8x128xf32>
    %cst_160 = arith.constant 0.000000e+00 : f32
    %236 = vector.broadcast %cst_160 : f32 to vector<8x128xf32>
    %c3_161 = arith.constant 3 : index
    %c0_162 = arith.constant 0 : index
    %c0_163 = arith.constant 0 : index
    %237 = vector.load %arg4[%c3_161, %c0_162, %c0_163] : memref<7x8x1xf32, #tpu.memory_space<vmem>>, vector<1x8x1xf32>
    %238 = vector.shape_cast %237 : vector<1x8x1xf32> to vector<8x1xf32>
    %239 = vector.broadcast %238 : vector<8x1xf32> to vector<8x128xf32>
    %240 = arith.addf %236, %239 : vector<8x128xf32>
    %c2_164 = arith.constant 2 : index
    %c0_165 = arith.constant 0 : index
    %c0_166 = arith.constant 0 : index
    %c0_167 = arith.constant 0 : index
    %241 = vector.load %arg3[%c2_164, %c0_165, %c0_166, %c0_167] : memref<6x3x8x8xbf16, #tpu.memory_space<vmem>>, vector<1x1x8x8xbf16>
    %242 = vector.shape_cast %241 : vector<1x1x8x8xbf16> to vector<8x8xbf16>
    %c1_i32_168 = arith.constant 1 : i32
    %243 = tpu.dynamic_rotate %198 by %c1_i32_168 dim 1 : vector<8x128xf32>, i32 -> vector<8x128xf32>
    %c1_i32_169 = arith.constant 1 : i32
    %244 = vector.broadcast %c1_i32_169 : i32 to vector<8x128xi32>
    %245 = arith.cmpi sge, %9, %244 : vector<8x128xi32>
    %cst_170 = arith.constant 0.000000e+00 : f32
    %246 = vector.broadcast %cst_170 : f32 to vector<8x128xf32>
    %247 = arith.select %245, %243, %246 : vector<8x128xi1>, vector<8x128xf32>
    %248 = arith.truncf %247 : vector<8x128xf32> to vector<8x128xbf16>
    %cst_171 = arith.constant dense<0.000000e+00> : vector<8x128xf32>
    %249 = tpu.matmul %242, %248, %cst_171 {dimension_numbers = #tpu.dot_dimension_numbers<[1], [0], [0], [1], [0, 0, 1, 1], [], []>} : vector<8x8xbf16>, vector<8x128xbf16>, vector<8x128xf32> -> vector<8x128xf32>
    %250 = arith.addf %240, %249 : vector<8x128xf32>
    %c2_172 = arith.constant 2 : index
    %c1_173 = arith.constant 1 : index
    %c0_174 = arith.constant 0 : index
    %c0_175 = arith.constant 0 : index
    %251 = vector.load %arg3[%c2_172, %c1_173, %c0_174, %c0_175] : memref<6x3x8x8xbf16, #tpu.memory_space<vmem>>, vector<1x1x8x8xbf16>
    %252 = vector.shape_cast %251 : vector<1x1x8x8xbf16> to vector<8x8xbf16>
    %253 = arith.truncf %203 : vector<8x128xf32> to vector<8x128xbf16>
    %cst_176 = arith.constant dense<0.000000e+00> : vector<8x128xf32>
    %254 = tpu.matmul %252, %253, %cst_176 {dimension_numbers = #tpu.dot_dimension_numbers<[1], [0], [0], [1], [0, 0, 1, 1], [], []>} : vector<8x8xbf16>, vector<8x128xbf16>, vector<8x128xf32> -> vector<8x128xf32>
    %255 = arith.addf %250, %254 : vector<8x128xf32>
    %c2_177 = arith.constant 2 : index
    %c2_178 = arith.constant 2 : index
    %c0_179 = arith.constant 0 : index
    %c0_180 = arith.constant 0 : index
    %256 = vector.load %arg3[%c2_177, %c2_178, %c0_179, %c0_180] : memref<6x3x8x8xbf16, #tpu.memory_space<vmem>>, vector<1x1x8x8xbf16>
    %257 = vector.shape_cast %256 : vector<1x1x8x8xbf16> to vector<8x8xbf16>
    %c126_i32 = arith.constant 126 : i32
    %258 = tpu.dynamic_rotate %198 by %c126_i32 dim 1 : vector<8x128xf32>, i32 -> vector<8x128xf32>
    %c126_i32_181 = arith.constant 126 : i32
    %259 = vector.broadcast %c126_i32_181 : i32 to vector<8x128xi32>
    %260 = arith.cmpi slt, %9, %259 : vector<8x128xi32>
    %cst_182 = arith.constant 0.000000e+00 : f32
    %261 = vector.broadcast %cst_182 : f32 to vector<8x128xf32>
    %262 = arith.select %260, %258, %261 : vector<8x128xi1>, vector<8x128xf32>
    %263 = arith.truncf %262 : vector<8x128xf32> to vector<8x128xbf16>
    %cst_183 = arith.constant dense<0.000000e+00> : vector<8x128xf32>
    %264 = tpu.matmul %257, %263, %cst_183 {dimension_numbers = #tpu.dot_dimension_numbers<[1], [0], [0], [1], [0, 0, 1, 1], [], []>} : vector<8x8xbf16>, vector<8x128xbf16>, vector<8x128xf32> -> vector<8x128xf32>
    %265 = arith.addf %255, %264 : vector<8x128xf32>
    %cst_184 = arith.constant 0.000000e+00 : f32
    %266 = vector.broadcast %cst_184 : f32 to vector<8x128xf32>
    %267 = arith.select %19, %265, %266 : vector<8x128xi1>, vector<8x128xf32>
    %cst_185 = arith.constant 0.000000e+00 : f32
    %268 = vector.broadcast %cst_185 : f32 to vector<8x128xf32>
    %269 = arith.cmpf oge, %235, %268 : vector<8x128xf32>
    %cst_186 = arith.constant 0.00999999977 : f32
    %270 = vector.broadcast %cst_186 : f32 to vector<8x128xf32>
    %271 = arith.mulf %270, %235 : vector<8x128xf32>
    %272 = arith.select %269, %235, %271 : vector<8x128xi1>, vector<8x128xf32>
    %cst_187 = arith.constant 0.000000e+00 : f32
    %273 = vector.broadcast %cst_187 : f32 to vector<8x128xf32>
    %274 = arith.cmpf oge, %267, %273 : vector<8x128xf32>
    %cst_188 = arith.constant 0.00999999977 : f32
    %275 = vector.broadcast %cst_188 : f32 to vector<8x128xf32>
    %276 = arith.mulf %275, %267 : vector<8x128xf32>
    %277 = arith.select %274, %267, %276 : vector<8x128xi1>, vector<8x128xf32>
    %cst_189 = arith.constant 0.000000e+00 : f32
    %278 = vector.broadcast %cst_189 : f32 to vector<8x128xf32>
    %c4 = arith.constant 4 : index
    %c0_190 = arith.constant 0 : index
    %c0_191 = arith.constant 0 : index
    %279 = vector.load %arg4[%c4, %c0_190, %c0_191] : memref<7x8x1xf32, #tpu.memory_space<vmem>>, vector<1x8x1xf32>
    %280 = vector.shape_cast %279 : vector<1x8x1xf32> to vector<8x1xf32>
    %281 = vector.broadcast %280 : vector<8x1xf32> to vector<8x128xf32>
    %282 = arith.addf %278, %281 : vector<8x128xf32>
    %c3_192 = arith.constant 3 : index
    %c0_193 = arith.constant 0 : index
    %c0_194 = arith.constant 0 : index
    %c0_195 = arith.constant 0 : index
    %283 = vector.load %arg3[%c3_192, %c0_193, %c0_194, %c0_195] : memref<6x3x8x8xbf16, #tpu.memory_space<vmem>>, vector<1x1x8x8xbf16>
    %284 = vector.shape_cast %283 : vector<1x1x8x8xbf16> to vector<8x8xbf16>
    %c1_i32_196 = arith.constant 1 : i32
    %285 = tpu.dynamic_rotate %277 by %c1_i32_196 dim 1 : vector<8x128xf32>, i32 -> vector<8x128xf32>
    %c1_i32_197 = arith.constant 1 : i32
    %286 = vector.broadcast %c1_i32_197 : i32 to vector<8x128xi32>
    %287 = arith.cmpi sge, %9, %286 : vector<8x128xi32>
    %cst_198 = arith.constant 0.000000e+00 : f32
    %288 = vector.broadcast %cst_198 : f32 to vector<8x128xf32>
    %289 = arith.select %287, %285, %288 : vector<8x128xi1>, vector<8x128xf32>
    %290 = arith.truncf %289 : vector<8x128xf32> to vector<8x128xbf16>
    %cst_199 = arith.constant dense<0.000000e+00> : vector<8x128xf32>
    %291 = tpu.matmul %284, %290, %cst_199 {dimension_numbers = #tpu.dot_dimension_numbers<[1], [0], [0], [1], [0, 0, 1, 1], [], []>} : vector<8x8xbf16>, vector<8x128xbf16>, vector<8x128xf32> -> vector<8x128xf32>
    %292 = arith.addf %282, %291 : vector<8x128xf32>
    %c3_200 = arith.constant 3 : index
    %c1_201 = arith.constant 1 : index
    %c0_202 = arith.constant 0 : index
    %c0_203 = arith.constant 0 : index
    %293 = vector.load %arg3[%c3_200, %c1_201, %c0_202, %c0_203] : memref<6x3x8x8xbf16, #tpu.memory_space<vmem>>, vector<1x1x8x8xbf16>
    %294 = vector.shape_cast %293 : vector<1x1x8x8xbf16> to vector<8x8xbf16>
    %295 = arith.truncf %272 : vector<8x128xf32> to vector<8x128xbf16>
    %cst_204 = arith.constant dense<0.000000e+00> : vector<8x128xf32>
    %296 = tpu.matmul %294, %295, %cst_204 {dimension_numbers = #tpu.dot_dimension_numbers<[1], [0], [0], [1], [0, 0, 1, 1], [], []>} : vector<8x8xbf16>, vector<8x128xbf16>, vector<8x128xf32> -> vector<8x128xf32>
    %297 = arith.addf %292, %296 : vector<8x128xf32>
    %c3_205 = arith.constant 3 : index
    %c2_206 = arith.constant 2 : index
    %c0_207 = arith.constant 0 : index
    %c0_208 = arith.constant 0 : index
    %298 = vector.load %arg3[%c3_205, %c2_206, %c0_207, %c0_208] : memref<6x3x8x8xbf16, #tpu.memory_space<vmem>>, vector<1x1x8x8xbf16>
    %299 = vector.shape_cast %298 : vector<1x1x8x8xbf16> to vector<8x8xbf16>
    %300 = arith.truncf %277 : vector<8x128xf32> to vector<8x128xbf16>
    %cst_209 = arith.constant dense<0.000000e+00> : vector<8x128xf32>
    %301 = tpu.matmul %299, %300, %cst_209 {dimension_numbers = #tpu.dot_dimension_numbers<[1], [0], [0], [1], [0, 0, 1, 1], [], []>} : vector<8x8xbf16>, vector<8x128xbf16>, vector<8x128xf32> -> vector<8x128xf32>
    %302 = arith.addf %297, %301 : vector<8x128xf32>
    %cst_210 = arith.constant 0.000000e+00 : f32
    %303 = vector.broadcast %cst_210 : f32 to vector<8x128xf32>
    %304 = arith.select %14, %302, %303 : vector<8x128xi1>, vector<8x128xf32>
    %cst_211 = arith.constant 0.000000e+00 : f32
    %305 = vector.broadcast %cst_211 : f32 to vector<8x128xf32>
    %c4_212 = arith.constant 4 : index
    %c0_213 = arith.constant 0 : index
    %c0_214 = arith.constant 0 : index
    %306 = vector.load %arg4[%c4_212, %c0_213, %c0_214] : memref<7x8x1xf32, #tpu.memory_space<vmem>>, vector<1x8x1xf32>
    %307 = vector.shape_cast %306 : vector<1x8x1xf32> to vector<8x1xf32>
    %308 = vector.broadcast %307 : vector<8x1xf32> to vector<8x128xf32>
    %309 = arith.addf %305, %308 : vector<8x128xf32>
    %c3_215 = arith.constant 3 : index
    %c0_216 = arith.constant 0 : index
    %c0_217 = arith.constant 0 : index
    %c0_218 = arith.constant 0 : index
    %310 = vector.load %arg3[%c3_215, %c0_216, %c0_217, %c0_218] : memref<6x3x8x8xbf16, #tpu.memory_space<vmem>>, vector<1x1x8x8xbf16>
    %311 = vector.shape_cast %310 : vector<1x1x8x8xbf16> to vector<8x8xbf16>
    %312 = arith.truncf %272 : vector<8x128xf32> to vector<8x128xbf16>
    %cst_219 = arith.constant dense<0.000000e+00> : vector<8x128xf32>
    %313 = tpu.matmul %311, %312, %cst_219 {dimension_numbers = #tpu.dot_dimension_numbers<[1], [0], [0], [1], [0, 0, 1, 1], [], []>} : vector<8x8xbf16>, vector<8x128xbf16>, vector<8x128xf32> -> vector<8x128xf32>
    %314 = arith.addf %309, %313 : vector<8x128xf32>
    %c3_220 = arith.constant 3 : index
    %c1_221 = arith.constant 1 : index
    %c0_222 = arith.constant 0 : index
    %c0_223 = arith.constant 0 : index
    %315 = vector.load %arg3[%c3_220, %c1_221, %c0_222, %c0_223] : memref<6x3x8x8xbf16, #tpu.memory_space<vmem>>, vector<1x1x8x8xbf16>
    %316 = vector.shape_cast %315 : vector<1x1x8x8xbf16> to vector<8x8xbf16>
    %317 = arith.truncf %277 : vector<8x128xf32> to vector<8x128xbf16>
    %cst_224 = arith.constant dense<0.000000e+00> : vector<8x128xf32>
    %318 = tpu.matmul %316, %317, %cst_224 {dimension_numbers = #tpu.dot_dimension_numbers<[1], [0], [0], [1], [0, 0, 1, 1], [], []>} : vector<8x8xbf16>, vector<8x128xbf16>, vector<8x128xf32> -> vector<8x128xf32>
    %319 = arith.addf %314, %318 : vector<8x128xf32>
    %c3_225 = arith.constant 3 : index
    %c2_226 = arith.constant 2 : index
    %c0_227 = arith.constant 0 : index
    %c0_228 = arith.constant 0 : index
    %320 = vector.load %arg3[%c3_225, %c2_226, %c0_227, %c0_228] : memref<6x3x8x8xbf16, #tpu.memory_space<vmem>>, vector<1x1x8x8xbf16>
    %321 = vector.shape_cast %320 : vector<1x1x8x8xbf16> to vector<8x8xbf16>
    %c127_i32_229 = arith.constant 127 : i32
    %322 = tpu.dynamic_rotate %272 by %c127_i32_229 dim 1 : vector<8x128xf32>, i32 -> vector<8x128xf32>
    %c127_i32_230 = arith.constant 127 : i32
    %323 = vector.broadcast %c127_i32_230 : i32 to vector<8x128xi32>
    %324 = arith.cmpi slt, %9, %323 : vector<8x128xi32>
    %cst_231 = arith.constant 0.000000e+00 : f32
    %325 = vector.broadcast %cst_231 : f32 to vector<8x128xf32>
    %326 = arith.select %324, %322, %325 : vector<8x128xi1>, vector<8x128xf32>
    %327 = arith.truncf %326 : vector<8x128xf32> to vector<8x128xbf16>
    %cst_232 = arith.constant dense<0.000000e+00> : vector<8x128xf32>
    %328 = tpu.matmul %321, %327, %cst_232 {dimension_numbers = #tpu.dot_dimension_numbers<[1], [0], [0], [1], [0, 0, 1, 1], [], []>} : vector<8x8xbf16>, vector<8x128xbf16>, vector<8x128xf32> -> vector<8x128xf32>
    %329 = arith.addf %319, %328 : vector<8x128xf32>
    %cst_233 = arith.constant 0.000000e+00 : f32
    %330 = vector.broadcast %cst_233 : f32 to vector<8x128xf32>
    %331 = arith.select %19, %329, %330 : vector<8x128xi1>, vector<8x128xf32>
    %332 = arith.addf %192, %304 : vector<8x128xf32>
    %333 = arith.addf %193, %331 : vector<8x128xf32>
    %cst_234 = arith.constant 0.000000e+00 : f32
    %334 = vector.broadcast %cst_234 : f32 to vector<8x128xf32>
    %335 = arith.cmpf oge, %332, %334 : vector<8x128xf32>
    %cst_235 = arith.constant 0.00999999977 : f32
    %336 = vector.broadcast %cst_235 : f32 to vector<8x128xf32>
    %337 = arith.mulf %336, %332 : vector<8x128xf32>
    %338 = arith.select %335, %332, %337 : vector<8x128xi1>, vector<8x128xf32>
    %cst_236 = arith.constant 0.000000e+00 : f32
    %339 = vector.broadcast %cst_236 : f32 to vector<8x128xf32>
    %340 = arith.cmpf oge, %333, %339 : vector<8x128xf32>
    %cst_237 = arith.constant 0.00999999977 : f32
    %341 = vector.broadcast %cst_237 : f32 to vector<8x128xf32>
    %342 = arith.mulf %341, %333 : vector<8x128xf32>
    %343 = arith.select %340, %333, %342 : vector<8x128xi1>, vector<8x128xf32>
    %cst_238 = arith.constant 0.000000e+00 : f32
    %344 = vector.broadcast %cst_238 : f32 to vector<8x128xf32>
    %c5 = arith.constant 5 : index
    %c0_239 = arith.constant 0 : index
    %c0_240 = arith.constant 0 : index
    %345 = vector.load %arg4[%c5, %c0_239, %c0_240] : memref<7x8x1xf32, #tpu.memory_space<vmem>>, vector<1x8x1xf32>
    %346 = vector.shape_cast %345 : vector<1x8x1xf32> to vector<8x1xf32>
    %347 = vector.broadcast %346 : vector<8x1xf32> to vector<8x128xf32>
    %348 = arith.addf %344, %347 : vector<8x128xf32>
    %c4_241 = arith.constant 4 : index
    %c0_242 = arith.constant 0 : index
    %c0_243 = arith.constant 0 : index
    %c0_244 = arith.constant 0 : index
    %349 = vector.load %arg3[%c4_241, %c0_242, %c0_243, %c0_244] : memref<6x3x8x8xbf16, #tpu.memory_space<vmem>>, vector<1x1x8x8xbf16>
    %350 = vector.shape_cast %349 : vector<1x1x8x8xbf16> to vector<8x8xbf16>
    %c5_i32 = arith.constant 5 : i32
    %351 = tpu.dynamic_rotate %343 by %c5_i32 dim 1 : vector<8x128xf32>, i32 -> vector<8x128xf32>
    %c5_i32_245 = arith.constant 5 : i32
    %352 = vector.broadcast %c5_i32_245 : i32 to vector<8x128xi32>
    %353 = arith.cmpi sge, %9, %352 : vector<8x128xi32>
    %cst_246 = arith.constant 0.000000e+00 : f32
    %354 = vector.broadcast %cst_246 : f32 to vector<8x128xf32>
    %355 = arith.select %353, %351, %354 : vector<8x128xi1>, vector<8x128xf32>
    %356 = arith.truncf %355 : vector<8x128xf32> to vector<8x128xbf16>
    %cst_247 = arith.constant dense<0.000000e+00> : vector<8x128xf32>
    %357 = tpu.matmul %350, %356, %cst_247 {dimension_numbers = #tpu.dot_dimension_numbers<[1], [0], [0], [1], [0, 0, 1, 1], [], []>} : vector<8x8xbf16>, vector<8x128xbf16>, vector<8x128xf32> -> vector<8x128xf32>
    %358 = arith.addf %348, %357 : vector<8x128xf32>
    %c4_248 = arith.constant 4 : index
    %c1_249 = arith.constant 1 : index
    %c0_250 = arith.constant 0 : index
    %c0_251 = arith.constant 0 : index
    %359 = vector.load %arg3[%c4_248, %c1_249, %c0_250, %c0_251] : memref<6x3x8x8xbf16, #tpu.memory_space<vmem>>, vector<1x1x8x8xbf16>
    %360 = vector.shape_cast %359 : vector<1x1x8x8xbf16> to vector<8x8xbf16>
    %361 = arith.truncf %338 : vector<8x128xf32> to vector<8x128xbf16>
    %cst_252 = arith.constant dense<0.000000e+00> : vector<8x128xf32>
    %362 = tpu.matmul %360, %361, %cst_252 {dimension_numbers = #tpu.dot_dimension_numbers<[1], [0], [0], [1], [0, 0, 1, 1], [], []>} : vector<8x8xbf16>, vector<8x128xbf16>, vector<8x128xf32> -> vector<8x128xf32>
    %363 = arith.addf %358, %362 : vector<8x128xf32>
    %c4_253 = arith.constant 4 : index
    %c2_254 = arith.constant 2 : index
    %c0_255 = arith.constant 0 : index
    %c0_256 = arith.constant 0 : index
    %364 = vector.load %arg3[%c4_253, %c2_254, %c0_255, %c0_256] : memref<6x3x8x8xbf16, #tpu.memory_space<vmem>>, vector<1x1x8x8xbf16>
    %365 = vector.shape_cast %364 : vector<1x1x8x8xbf16> to vector<8x8xbf16>
    %c124_i32 = arith.constant 124 : i32
    %366 = tpu.dynamic_rotate %343 by %c124_i32 dim 1 : vector<8x128xf32>, i32 -> vector<8x128xf32>
    %c124_i32_257 = arith.constant 124 : i32
    %367 = vector.broadcast %c124_i32_257 : i32 to vector<8x128xi32>
    %368 = arith.cmpi slt, %9, %367 : vector<8x128xi32>
    %cst_258 = arith.constant 0.000000e+00 : f32
    %369 = vector.broadcast %cst_258 : f32 to vector<8x128xf32>
    %370 = arith.select %368, %366, %369 : vector<8x128xi1>, vector<8x128xf32>
    %371 = arith.truncf %370 : vector<8x128xf32> to vector<8x128xbf16>
    %cst_259 = arith.constant dense<0.000000e+00> : vector<8x128xf32>
    %372 = tpu.matmul %365, %371, %cst_259 {dimension_numbers = #tpu.dot_dimension_numbers<[1], [0], [0], [1], [0, 0, 1, 1], [], []>} : vector<8x8xbf16>, vector<8x128xbf16>, vector<8x128xf32> -> vector<8x128xf32>
    %373 = arith.addf %363, %372 : vector<8x128xf32>
    %cst_260 = arith.constant 0.000000e+00 : f32
    %374 = vector.broadcast %cst_260 : f32 to vector<8x128xf32>
    %375 = arith.select %14, %373, %374 : vector<8x128xi1>, vector<8x128xf32>
    %cst_261 = arith.constant 0.000000e+00 : f32
    %376 = vector.broadcast %cst_261 : f32 to vector<8x128xf32>
    %c5_262 = arith.constant 5 : index
    %c0_263 = arith.constant 0 : index
    %c0_264 = arith.constant 0 : index
    %377 = vector.load %arg4[%c5_262, %c0_263, %c0_264] : memref<7x8x1xf32, #tpu.memory_space<vmem>>, vector<1x8x1xf32>
    %378 = vector.shape_cast %377 : vector<1x8x1xf32> to vector<8x1xf32>
    %379 = vector.broadcast %378 : vector<8x1xf32> to vector<8x128xf32>
    %380 = arith.addf %376, %379 : vector<8x128xf32>
    %c4_265 = arith.constant 4 : index
    %c0_266 = arith.constant 0 : index
    %c0_267 = arith.constant 0 : index
    %c0_268 = arith.constant 0 : index
    %381 = vector.load %arg3[%c4_265, %c0_266, %c0_267, %c0_268] : memref<6x3x8x8xbf16, #tpu.memory_space<vmem>>, vector<1x1x8x8xbf16>
    %382 = vector.shape_cast %381 : vector<1x1x8x8xbf16> to vector<8x8xbf16>
    %c4_i32 = arith.constant 4 : i32
    %383 = tpu.dynamic_rotate %338 by %c4_i32 dim 1 : vector<8x128xf32>, i32 -> vector<8x128xf32>
    %c4_i32_269 = arith.constant 4 : i32
    %384 = vector.broadcast %c4_i32_269 : i32 to vector<8x128xi32>
    %385 = arith.cmpi sge, %9, %384 : vector<8x128xi32>
    %cst_270 = arith.constant 0.000000e+00 : f32
    %386 = vector.broadcast %cst_270 : f32 to vector<8x128xf32>
    %387 = arith.select %385, %383, %386 : vector<8x128xi1>, vector<8x128xf32>
    %388 = arith.truncf %387 : vector<8x128xf32> to vector<8x128xbf16>
    %cst_271 = arith.constant dense<0.000000e+00> : vector<8x128xf32>
    %389 = tpu.matmul %382, %388, %cst_271 {dimension_numbers = #tpu.dot_dimension_numbers<[1], [0], [0], [1], [0, 0, 1, 1], [], []>} : vector<8x8xbf16>, vector<8x128xbf16>, vector<8x128xf32> -> vector<8x128xf32>
    %390 = arith.addf %380, %389 : vector<8x128xf32>
    %c4_272 = arith.constant 4 : index
    %c1_273 = arith.constant 1 : index
    %c0_274 = arith.constant 0 : index
    %c0_275 = arith.constant 0 : index
    %391 = vector.load %arg3[%c4_272, %c1_273, %c0_274, %c0_275] : memref<6x3x8x8xbf16, #tpu.memory_space<vmem>>, vector<1x1x8x8xbf16>
    %392 = vector.shape_cast %391 : vector<1x1x8x8xbf16> to vector<8x8xbf16>
    %393 = arith.truncf %343 : vector<8x128xf32> to vector<8x128xbf16>
    %cst_276 = arith.constant dense<0.000000e+00> : vector<8x128xf32>
    %394 = tpu.matmul %392, %393, %cst_276 {dimension_numbers = #tpu.dot_dimension_numbers<[1], [0], [0], [1], [0, 0, 1, 1], [], []>} : vector<8x8xbf16>, vector<8x128xbf16>, vector<8x128xf32> -> vector<8x128xf32>
    %395 = arith.addf %390, %394 : vector<8x128xf32>
    %c4_277 = arith.constant 4 : index
    %c2_278 = arith.constant 2 : index
    %c0_279 = arith.constant 0 : index
    %c0_280 = arith.constant 0 : index
    %396 = vector.load %arg3[%c4_277, %c2_278, %c0_279, %c0_280] : memref<6x3x8x8xbf16, #tpu.memory_space<vmem>>, vector<1x1x8x8xbf16>
    %397 = vector.shape_cast %396 : vector<1x1x8x8xbf16> to vector<8x8xbf16>
    %c123_i32 = arith.constant 123 : i32
    %398 = tpu.dynamic_rotate %338 by %c123_i32 dim 1 : vector<8x128xf32>, i32 -> vector<8x128xf32>
    %c123_i32_281 = arith.constant 123 : i32
    %399 = vector.broadcast %c123_i32_281 : i32 to vector<8x128xi32>
    %400 = arith.cmpi slt, %9, %399 : vector<8x128xi32>
    %cst_282 = arith.constant 0.000000e+00 : f32
    %401 = vector.broadcast %cst_282 : f32 to vector<8x128xf32>
    %402 = arith.select %400, %398, %401 : vector<8x128xi1>, vector<8x128xf32>
    %403 = arith.truncf %402 : vector<8x128xf32> to vector<8x128xbf16>
    %cst_283 = arith.constant dense<0.000000e+00> : vector<8x128xf32>
    %404 = tpu.matmul %397, %403, %cst_283 {dimension_numbers = #tpu.dot_dimension_numbers<[1], [0], [0], [1], [0, 0, 1, 1], [], []>} : vector<8x8xbf16>, vector<8x128xbf16>, vector<8x128xf32> -> vector<8x128xf32>
    %405 = arith.addf %395, %404 : vector<8x128xf32>
    %cst_284 = arith.constant 0.000000e+00 : f32
    %406 = vector.broadcast %cst_284 : f32 to vector<8x128xf32>
    %407 = arith.select %19, %405, %406 : vector<8x128xi1>, vector<8x128xf32>
    %cst_285 = arith.constant 0.000000e+00 : f32
    %408 = vector.broadcast %cst_285 : f32 to vector<8x128xf32>
    %409 = arith.cmpf oge, %375, %408 : vector<8x128xf32>
    %cst_286 = arith.constant 0.00999999977 : f32
    %410 = vector.broadcast %cst_286 : f32 to vector<8x128xf32>
    %411 = arith.mulf %410, %375 : vector<8x128xf32>
    %412 = arith.select %409, %375, %411 : vector<8x128xi1>, vector<8x128xf32>
    %cst_287 = arith.constant 0.000000e+00 : f32
    %413 = vector.broadcast %cst_287 : f32 to vector<8x128xf32>
    %414 = arith.cmpf oge, %407, %413 : vector<8x128xf32>
    %cst_288 = arith.constant 0.00999999977 : f32
    %415 = vector.broadcast %cst_288 : f32 to vector<8x128xf32>
    %416 = arith.mulf %415, %407 : vector<8x128xf32>
    %417 = arith.select %414, %407, %416 : vector<8x128xi1>, vector<8x128xf32>
    %cst_289 = arith.constant 0.000000e+00 : f32
    %418 = vector.broadcast %cst_289 : f32 to vector<8x128xf32>
    %c6 = arith.constant 6 : index
    %c0_290 = arith.constant 0 : index
    %c0_291 = arith.constant 0 : index
    %419 = vector.load %arg4[%c6, %c0_290, %c0_291] : memref<7x8x1xf32, #tpu.memory_space<vmem>>, vector<1x8x1xf32>
    %420 = vector.shape_cast %419 : vector<1x8x1xf32> to vector<8x1xf32>
    %421 = vector.broadcast %420 : vector<8x1xf32> to vector<8x128xf32>
    %422 = arith.addf %418, %421 : vector<8x128xf32>
    %c5_292 = arith.constant 5 : index
    %c0_293 = arith.constant 0 : index
    %c0_294 = arith.constant 0 : index
    %c0_295 = arith.constant 0 : index
    %423 = vector.load %arg3[%c5_292, %c0_293, %c0_294, %c0_295] : memref<6x3x8x8xbf16, #tpu.memory_space<vmem>>, vector<1x1x8x8xbf16>
    %424 = vector.shape_cast %423 : vector<1x1x8x8xbf16> to vector<8x8xbf16>
    %c1_i32_296 = arith.constant 1 : i32
    %425 = tpu.dynamic_rotate %417 by %c1_i32_296 dim 1 : vector<8x128xf32>, i32 -> vector<8x128xf32>
    %c1_i32_297 = arith.constant 1 : i32
    %426 = vector.broadcast %c1_i32_297 : i32 to vector<8x128xi32>
    %427 = arith.cmpi sge, %9, %426 : vector<8x128xi32>
    %cst_298 = arith.constant 0.000000e+00 : f32
    %428 = vector.broadcast %cst_298 : f32 to vector<8x128xf32>
    %429 = arith.select %427, %425, %428 : vector<8x128xi1>, vector<8x128xf32>
    %430 = arith.truncf %429 : vector<8x128xf32> to vector<8x128xbf16>
    %cst_299 = arith.constant dense<0.000000e+00> : vector<8x128xf32>
    %431 = tpu.matmul %424, %430, %cst_299 {dimension_numbers = #tpu.dot_dimension_numbers<[1], [0], [0], [1], [0, 0, 1, 1], [], []>} : vector<8x8xbf16>, vector<8x128xbf16>, vector<8x128xf32> -> vector<8x128xf32>
    %432 = arith.addf %422, %431 : vector<8x128xf32>
    %c5_300 = arith.constant 5 : index
    %c1_301 = arith.constant 1 : index
    %c0_302 = arith.constant 0 : index
    %c0_303 = arith.constant 0 : index
    %433 = vector.load %arg3[%c5_300, %c1_301, %c0_302, %c0_303] : memref<6x3x8x8xbf16, #tpu.memory_space<vmem>>, vector<1x1x8x8xbf16>
    %434 = vector.shape_cast %433 : vector<1x1x8x8xbf16> to vector<8x8xbf16>
    %435 = arith.truncf %412 : vector<8x128xf32> to vector<8x128xbf16>
    %cst_304 = arith.constant dense<0.000000e+00> : vector<8x128xf32>
    %436 = tpu.matmul %434, %435, %cst_304 {dimension_numbers = #tpu.dot_dimension_numbers<[1], [0], [0], [1], [0, 0, 1, 1], [], []>} : vector<8x8xbf16>, vector<8x128xbf16>, vector<8x128xf32> -> vector<8x128xf32>
    %437 = arith.addf %432, %436 : vector<8x128xf32>
    %c5_305 = arith.constant 5 : index
    %c2_306 = arith.constant 2 : index
    %c0_307 = arith.constant 0 : index
    %c0_308 = arith.constant 0 : index
    %438 = vector.load %arg3[%c5_305, %c2_306, %c0_307, %c0_308] : memref<6x3x8x8xbf16, #tpu.memory_space<vmem>>, vector<1x1x8x8xbf16>
    %439 = vector.shape_cast %438 : vector<1x1x8x8xbf16> to vector<8x8xbf16>
    %440 = arith.truncf %417 : vector<8x128xf32> to vector<8x128xbf16>
    %cst_309 = arith.constant dense<0.000000e+00> : vector<8x128xf32>
    %441 = tpu.matmul %439, %440, %cst_309 {dimension_numbers = #tpu.dot_dimension_numbers<[1], [0], [0], [1], [0, 0, 1, 1], [], []>} : vector<8x8xbf16>, vector<8x128xbf16>, vector<8x128xf32> -> vector<8x128xf32>
    %442 = arith.addf %437, %441 : vector<8x128xf32>
    %cst_310 = arith.constant 0.000000e+00 : f32
    %443 = vector.broadcast %cst_310 : f32 to vector<8x128xf32>
    %444 = arith.select %14, %442, %443 : vector<8x128xi1>, vector<8x128xf32>
    %cst_311 = arith.constant 0.000000e+00 : f32
    %445 = vector.broadcast %cst_311 : f32 to vector<8x128xf32>
    %c6_312 = arith.constant 6 : index
    %c0_313 = arith.constant 0 : index
    %c0_314 = arith.constant 0 : index
    %446 = vector.load %arg4[%c6_312, %c0_313, %c0_314] : memref<7x8x1xf32, #tpu.memory_space<vmem>>, vector<1x8x1xf32>
    %447 = vector.shape_cast %446 : vector<1x8x1xf32> to vector<8x1xf32>
    %448 = vector.broadcast %447 : vector<8x1xf32> to vector<8x128xf32>
    %449 = arith.addf %445, %448 : vector<8x128xf32>
    %c5_315 = arith.constant 5 : index
    %c0_316 = arith.constant 0 : index
    %c0_317 = arith.constant 0 : index
    %c0_318 = arith.constant 0 : index
    %450 = vector.load %arg3[%c5_315, %c0_316, %c0_317, %c0_318] : memref<6x3x8x8xbf16, #tpu.memory_space<vmem>>, vector<1x1x8x8xbf16>
    %451 = vector.shape_cast %450 : vector<1x1x8x8xbf16> to vector<8x8xbf16>
    %452 = arith.truncf %412 : vector<8x128xf32> to vector<8x128xbf16>
    %cst_319 = arith.constant dense<0.000000e+00> : vector<8x128xf32>
    %453 = tpu.matmul %451, %452, %cst_319 {dimension_numbers = #tpu.dot_dimension_numbers<[1], [0], [0], [1], [0, 0, 1, 1], [], []>} : vector<8x8xbf16>, vector<8x128xbf16>, vector<8x128xf32> -> vector<8x128xf32>
    %454 = arith.addf %449, %453 : vector<8x128xf32>
    %c5_320 = arith.constant 5 : index
    %c1_321 = arith.constant 1 : index
    %c0_322 = arith.constant 0 : index
    %c0_323 = arith.constant 0 : index
    %455 = vector.load %arg3[%c5_320, %c1_321, %c0_322, %c0_323] : memref<6x3x8x8xbf16, #tpu.memory_space<vmem>>, vector<1x1x8x8xbf16>
    %456 = vector.shape_cast %455 : vector<1x1x8x8xbf16> to vector<8x8xbf16>
    %457 = arith.truncf %417 : vector<8x128xf32> to vector<8x128xbf16>
    %cst_324 = arith.constant dense<0.000000e+00> : vector<8x128xf32>
    %458 = tpu.matmul %456, %457, %cst_324 {dimension_numbers = #tpu.dot_dimension_numbers<[1], [0], [0], [1], [0, 0, 1, 1], [], []>} : vector<8x8xbf16>, vector<8x128xbf16>, vector<8x128xf32> -> vector<8x128xf32>
    %459 = arith.addf %454, %458 : vector<8x128xf32>
    %c5_325 = arith.constant 5 : index
    %c2_326 = arith.constant 2 : index
    %c0_327 = arith.constant 0 : index
    %c0_328 = arith.constant 0 : index
    %460 = vector.load %arg3[%c5_325, %c2_326, %c0_327, %c0_328] : memref<6x3x8x8xbf16, #tpu.memory_space<vmem>>, vector<1x1x8x8xbf16>
    %461 = vector.shape_cast %460 : vector<1x1x8x8xbf16> to vector<8x8xbf16>
    %c127_i32_329 = arith.constant 127 : i32
    %462 = tpu.dynamic_rotate %412 by %c127_i32_329 dim 1 : vector<8x128xf32>, i32 -> vector<8x128xf32>
    %c127_i32_330 = arith.constant 127 : i32
    %463 = vector.broadcast %c127_i32_330 : i32 to vector<8x128xi32>
    %464 = arith.cmpi slt, %9, %463 : vector<8x128xi32>
    %cst_331 = arith.constant 0.000000e+00 : f32
    %465 = vector.broadcast %cst_331 : f32 to vector<8x128xf32>
    %466 = arith.select %464, %462, %465 : vector<8x128xi1>, vector<8x128xf32>
    %467 = arith.truncf %466 : vector<8x128xf32> to vector<8x128xbf16>
    %cst_332 = arith.constant dense<0.000000e+00> : vector<8x128xf32>
    %468 = tpu.matmul %461, %467, %cst_332 {dimension_numbers = #tpu.dot_dimension_numbers<[1], [0], [0], [1], [0, 0, 1, 1], [], []>} : vector<8x8xbf16>, vector<8x128xbf16>, vector<8x128xf32> -> vector<8x128xf32>
    %469 = arith.addf %459, %468 : vector<8x128xf32>
    %cst_333 = arith.constant 0.000000e+00 : f32
    %470 = vector.broadcast %cst_333 : f32 to vector<8x128xf32>
    %471 = arith.select %19, %469, %470 : vector<8x128xi1>, vector<8x128xf32>
    %472 = arith.addf %332, %444 : vector<8x128xf32>
    %473 = arith.addf %333, %471 : vector<8x128xf32>
    %c0_334 = arith.constant 0 : index
    %c0_335 = arith.constant 0 : index
    %c0_336 = arith.constant 0 : index
    %474 = vector.load %arg5[%c0_334, %c0_335, %c0_336] : memref<1x16x128xf32, #tpu.memory_space<vmem>>, vector<1x8x128xf32>
    %475 = vector.shape_cast %474 : vector<1x8x128xf32> to vector<8x128xf32>
    %476 = vector.shape_cast %472 : vector<8x128xf32> to vector<1x8x128xf32>
    tpu.vector_store %arg5[%c0_334, %c0_335, %c0_336], %476 {strides = array<i32>} : memref<1x16x128xf32, #tpu.memory_space<vmem>>, vector<1x8x128xf32>,
    %c0_337 = arith.constant 0 : index
    %c8 = arith.constant 8 : index
    %c0_338 = arith.constant 0 : index
    %477 = vector.load %arg5[%c0_337, %c8, %c0_338] : memref<1x16x128xf32, #tpu.memory_space<vmem>>, vector<1x8x128xf32>
    %478 = vector.shape_cast %477 : vector<1x8x128xf32> to vector<8x128xf32>
    %479 = vector.shape_cast %473 : vector<8x128xf32> to vector<1x8x128xf32>
    tpu.vector_store %arg5[%c0_337, %c8, %c0_338], %479 {strides = array<i32>} : memref<1x16x128xf32, #tpu.memory_space<vmem>>, vector<1x8x128xf32>,
    return
  }
  func.func @transform_0(%arg0: i32) -> (i32, i32, i32) {
    %c0_i32 = arith.constant 0 : i32
    %c0_i32_0 = arith.constant 0 : i32
    %c0_i32_1 = arith.constant 0 : i32
    return %arg0, %c0_i32, %c0_i32_0 : i32, i32, i32
  }
  func.func @transform_1(%arg0: i32) -> (i32, i32, i32) {
    %c0_i32 = arith.constant 0 : i32
    %c0_i32_0 = arith.constant 0 : i32
    %c0_i32_1 = arith.constant 0 : i32
    %c0_i32_2 = arith.constant 0 : i32
    return %c0_i32, %c0_i32_0, %c0_i32_1 : i32, i32, i32
  }
  func.func @transform_2(%arg0: i32) -> (i32, i32, i32, i32) {
    %c0_i32 = arith.constant 0 : i32
    %c0_i32_0 = arith.constant 0 : i32
    %c0_i32_1 = arith.constant 0 : i32
    %c0_i32_2 = arith.constant 0 : i32
    %c0_i32_3 = arith.constant 0 : i32
    return %c0_i32, %c0_i32_0, %c0_i32_1, %c0_i32_2 : i32, i32, i32, i32
  }
  func.func @transform_3(%arg0: i32) -> (i32, i32, i32) {
    %c0_i32 = arith.constant 0 : i32
    %c0_i32_0 = arith.constant 0 : i32
    %c0_i32_1 = arith.constant 0 : i32
    %c0_i32_2 = arith.constant 0 : i32
    return %c0_i32, %c0_i32_0, %c0_i32_1 : i32, i32, i32
  }
  func.func @transform_4(%arg0: i32) -> (i32, i32, i32) {
    %c0_i32 = arith.constant 0 : i32
    %c0_i32_0 = arith.constant 0 : i32
    %c0_i32_1 = arith.constant 0 : i32
    return %arg0, %c0_i32, %c0_i32_0 : i32, i32, i32
  }
}

</mosaic_0001>

<llo_original>
// kernel: tpu_custom_call.1
$region0: #{tpu_custom_call.1}
  #allocation0 [shape = 'u32[]', space=smem, size = 0x4, offset = 0x4, fixed_abs, tag = 'smem constant byte address 0x4 - core index']
  #allocation1 [shape = 'u32[72,128]{1,0:T(1,128)}', space=vmem, size = 0x9000, scoped, tag = 'internal scratch']
  %s0 = inlined_call_operand.vmem [shape: bf16[2,8,128], index: 0, kind: input, shape index: {}]
  %s1 = inlined_call_operand.vmem [shape: bf16[4,8,8], index: 1, kind: input, shape index: {}]
  %s2 = inlined_call_operand.hbm [shape: bf16[6,3,8,8], index: 2, kind: input, shape index: {}]
  %s3 = inlined_call_operand.vmem [shape: f32[7,8,1], index: 3, kind: input, shape index: {}]
  %s4 = inlined_call_operand.hbm [shape: f32[2,16,128], index: 4, kind: output, shape index: {}]
  %s5 = sld [smem:[#allocation0]]
  $region53: #{tpu_custom_call.1} parent=0
    _
  %s7 = ssub.s32 1, %s5
  %s8 = scalar_select 0, %s7, %s5
  $region1: #{tpu_custom_call.1} parent=0
    #allocation2 [shape = 'u8[36864]{0}', space=vmem, size = 0x9000, scoped, tag = 'input window, operand 2, single buffered']
    #allocation3 [shape = 's32[2]{0}', space=sflag, size = 0x8, scoped, tag = 'scoped memory for tpu_custom_call.1']
    #allocation4 [shape = 's32[2]{0}', space=sflag, size = 0x8, scoped, tag = 'scoped memory for tpu_custom_call.1']
    #allocation5 [shape = 'u8[16384]{0}', space=vmem, size = 0x4000, scoped, tag = 'output window, operand 0']
    %9 = vsyncpa [#allocation3], 0
    %10 = vsyncpa [#allocation4], 0
    %s11 = scalar_lea.sflag [#allocation4], 1
    %12 = vsyncpa %s11, 0
    loop: start=0, step=1, limit=4
    $region2: #{tpu_custom_call.1} parent=1 // loop_pre_header
      _
    $region3: #{tpu_custom_call.1} parent=1 // loop_header
      %s14 = sphi 0, %s18
      %p15 = scmp.ge.s32.totalorder %s14, 4
      %s24 = sphi 0, %s26
      %s27 = sphi 0, %s24
      %s28 = sphi 0, %s27
      %s44 = sphi 0, %s28
      %s48 = sphi 0, %s48
      %s50 = sphi 0, %s48
      %s51 = sphi 0, %s50
      %s65 = sphi 0, %s51
      %s69 = sphi 0, %s69
      %s71 = sphi 0, %s69
      %s72 = sphi 0, %s71
      %s86 = sphi 0, %s72
      %s90 = sphi 0, %s90
      %s92 = sphi 0, %s90
      %s93 = sphi 0, %s92
      %s107 = sphi 0, %s93
      %s113 = sphi 0, %s115
      %s116 = sphi 0, %s113
      %s117 = sphi 0, %s116
      %s133 = sphi 0, %s117
    $region4: #{tpu_custom_call.1} parent=1 // loop_header_branch
      %17 = sbr.rel (%p15) target = $region8
    $region5: #{tpu_custom_call.1} parent=1 // loop_body
      %s19 = ssub.s32 %s14, 1
      %s20 = ssub.s32 %s14, 2
      %s21 = sadd.s32 %s14, 1
      %s22 = ssub.s32 %s14, %s21
      %p23 = scmp.eq.s32.totalorder %s22, 0
      %s25 = sadd.s32 %s24, 1
      %s26 = scalar_select %p23, %s24, %s25
      %p29 = pneg %p23
      %p30 = scmp.eq.s32.totalorder %s14, 1
      %p31 = por %p29, %p30
      %p32 = scmp.ne.s32.totalorder %s24, %s27
      %p33 = scmp.eq.s32.totalorder %s14, 0
      %p34 = por %p32, %p33
      %p35 = scmp.ne.s32.totalorder %s24, %s27
      %p36 = scmp.eq.s32.totalorder %s19, 1
      %p37 = por %p35, %p36
      %p38 = scmp.ne.s32.totalorder %s27, %s28
      %p39 = scmp.eq.s32.totalorder %s19, 0
      %p40 = por %p38, %p39
      %p41 = scmp.ne.s32.totalorder %s27, %s28
      %p42 = scmp.eq.s32.totalorder %s20, 1
      %p43 = por %p41, %p42
      %p45 = scmp.ne.s32.totalorder %s28, %s44
      %p46 = scmp.eq.s32.totalorder %s20, 0
      %p47 = por %p45, %p46
      %s49 = sadd.s32 %s48, 1
      %p52 = scmp.eq.s32.totalorder %s14, 1
      %p53 = scmp.ne.s32.totalorder %s48, %s50
      %p54 = scmp.eq.s32.totalorder %s14, 0
      %p55 = por %p53, %p54
      %p56 = scmp.ne.s32.totalorder %s48, %s50
      %p57 = scmp.eq.s32.totalorder %s19, 1
      %p58 = por %p56, %p57
      %p59 = scmp.ne.s32.totalorder %s50, %s51
      %p60 = scmp.eq.s32.totalorder %s19, 0
      %p61 = por %p59, %p60
      %p62 = scmp.ne.s32.totalorder %s50, %s51
      %p63 = scmp.eq.s32.totalorder %s20, 1
      %p64 = por %p62, %p63
      %p66 = scmp.ne.s32.totalorder %s51, %s65
      %p67 = scmp.eq.s32.totalorder %s20, 0
      %p68 = por %p66, %p67
      %s70 = sadd.s32 %s69, 1
      %p73 = scmp.eq.s32.totalorder %s14, 1
      %p74 = scmp.ne.s32.totalorder %s69, %s71
      %p75 = scmp.eq.s32.totalorder %s14, 0
      %p76 = por %p74, %p75
      %p77 = scmp.ne.s32.totalorder %s69, %s71
      %p78 = scmp.eq.s32.totalorder %s19, 1
      %p79 = por %p77, %p78
      %p80 = scmp.ne.s32.totalorder %s71, %s72
      %p81 = scmp.eq.s32.totalorder %s19, 0
      %p82 = por %p80, %p81
      %p83 = scmp.ne.s32.totalorder %s71, %s72
      %p84 = scmp.eq.s32.totalorder %s20, 1
      %p85 = por %p83, %p84
      %p87 = scmp.ne.s32.totalorder %s72, %s86
      %p88 = scmp.eq.s32.totalorder %s20, 0
      %p89 = por %p87, %p88
      %s91 = sadd.s32 %s90, 1
      %p94 = scmp.eq.s32.totalorder %s14, 1
      %p95 = scmp.ne.s32.totalorder %s90, %s92
      %p96 = scmp.eq.s32.totalorder %s14, 0
      %p97 = por %p95, %p96
      %p98 = scmp.ne.s32.totalorder %s90, %s92
      %p99 = scmp.eq.s32.totalorder %s19, 1
      %p100 = por %p98, %p99
      %p101 = scmp.ne.s32.totalorder %s92, %s93
      %p102 = scmp.eq.s32.totalorder %s19, 0
      %p103 = por %p101, %p102
      %p104 = scmp.ne.s32.totalorder %s92, %s93
      %p105 = scmp.eq.s32.totalorder %s20, 1
      %p106 = por %p104, %p105
      %p108 = scmp.ne.s32.totalorder %s93, %s107
      %p109 = scmp.eq.s32.totalorder %s20, 0
      %p110 = por %p108, %p109
      %s111 = ssub.s32 %s14, %s21
      %p112 = scmp.eq.s32.totalorder %s111, 0
      %s114 = sadd.s32 %s113, 1
      %s115 = scalar_select %p112, %s113, %s114
      %p118 = pneg %p112
      %p119 = scmp.eq.s32.totalorder %s14, 1
      %p120 = por %p118, %p119
      %p121 = scmp.ne.s32.totalorder %s113, %s116
      %p122 = scmp.eq.s32.totalorder %s14, 0
      %p123 = por %p121, %p122
      %p124 = scmp.ne.s32.totalorder %s113, %s116
      %p125 = scmp.eq.s32.totalorder %s19, 1
      %p126 = por %p124, %p125
      %p127 = scmp.ne.s32.totalorder %s116, %s117
      %p128 = scmp.eq.s32.totalorder %s19, 0
      %p129 = por %p127, %p128
      %p130 = scmp.ne.s32.totalorder %s116, %s117
      %p131 = scmp.eq.s32.totalorder %s20, 1
      %p132 = por %p130, %p131
      %p134 = scmp.ne.s32.totalorder %s117, %s133
      %p135 = scmp.eq.s32.totalorder %s20, 0
      %p136 = por %p134, %p135
      %p137 = scmp.le.s32.totalorder 1, %s14
      %p138 = scmp.lt.s32.totalorder %s14, 3
      %p139 = pnand %p137, %p138
      %p140 = pneg %p139
      // Predicated region
      $region9: #{tpu_custom_call.1} parent=5 // pred_check
        _
      $region10: #{tpu_custom_call.1} parent=5 // pred_check_branch
        %142 = sbr.rel (%p139) target = $region12
      $region11: #{tpu_custom_call.1} parent=5 // pred_region
        %s143 = ssub.s32 %s14, 1
        // Predicated region
        $region13: #{tpu_custom_call.1} parent=11 // pred_check
          %p144 = pneg %p61
        $region14: #{tpu_custom_call.1} parent=11 // pred_check_branch
          %146 = sbr.rel (%p144) target = $region16
        $region15: #{tpu_custom_call.1} parent=11 // pred_region
          _
        $region16: #{tpu_custom_call.1} parent=11 // pred_fallthru
          _
        // Predicated region
        $region17: #{tpu_custom_call.1} parent=11 // pred_check
          %p147 = pneg %p82
        $region18: #{tpu_custom_call.1} parent=11 // pred_check_branch
          %149 = sbr.rel (%p147) target = $region20
        $region19: #{tpu_custom_call.1} parent=11 // pred_region
          %151 = vsyncadd [#allocation3], 0
          %s152 = sshll.u32 %s2, 4
          %s153 = int_to_ptr.hbm [resolvable:$true] %s152
          %s154 = sshll.u32 [#allocation2], 4
          %s155 = int_to_ptr.vmem [resolvable:$true] %s154
          %160 = dma.hbm_to_vmem [thread:$0]  %s153, 1152, %s155, [#allocation3], 64, 64, 4
        $region20: #{tpu_custom_call.1} parent=11 // pred_fallthru
          _
        // Predicated region
        $region21: #{tpu_custom_call.1} parent=11 // pred_check
          %p161 = pneg %p103
        $region22: #{tpu_custom_call.1} parent=11 // pred_check_branch
          %163 = sbr.rel (%p161) target = $region24
        $region23: #{tpu_custom_call.1} parent=11 // pred_region
          _
        $region24: #{tpu_custom_call.1} parent=11 // pred_fallthru
          _
      $region12: #{tpu_custom_call.1} parent=5 // pred_fallthru
        _
      %p164 = scmp.lt.s32.totalorder %s14, 2
      // Predicated region
      $region25: #{tpu_custom_call.1} parent=5 // pred_check
        %p165 = pneg %p164
      $region26: #{tpu_custom_call.1} parent=5 // pred_check_branch
        %167 = sbr.rel (%p165) target = $region28
      $region27: #{tpu_custom_call.1} parent=5 // pred_region
        // Predicated region
        $region29: #{tpu_custom_call.1} parent=27 // pred_check
          %p168 = pneg %p34
        $region30: #{tpu_custom_call.1} parent=27 // pred_check_branch
          %170 = sbr.rel (%p168) target = $region32
        $region31: #{tpu_custom_call.1} parent=27 // pred_region
          %p171 = scmp.lt.s32.totalorder %s14, 1
          %s172 = scalar_select %p171, %s14, 1
          %s173 = smul.addr %s172, 4
          %s174 = scalar_lea.vmem %s0, %s173
        $region32: #{tpu_custom_call.1} parent=27 // pred_fallthru
          _
      $region28: #{tpu_custom_call.1} parent=5 // pred_fallthru
        _
      %p175 = scmp.le.s32.totalorder 1, %s14
      %p176 = scmp.lt.s32.totalorder %s14, 3
      %p177 = pnand %p175, %p176
      %p178 = pneg %p177
      // Predicated region
      $region33: #{tpu_custom_call.1} parent=5 // pred_check
        _
      $region34: #{tpu_custom_call.1} parent=5 // pred_check_branch
        %180 = sbr.rel (%p177) target = $region36
      $region35: #{tpu_custom_call.1} parent=5 // pred_region
        %s181 = ssub.s32 %s14, 1
        // Predicated region
        $region37: #{tpu_custom_call.1} parent=35 // pred_check
          %p182 = pneg %p82
        $region38: #{tpu_custom_call.1} parent=35 // pred_check_branch
          %184 = sbr.rel (%p182) target = $region40
        $region39: #{tpu_custom_call.1} parent=35 // pred_region
          %186 = dma.done [#allocation3], 1152
        $region40: #{tpu_custom_call.1} parent=35 // pred_fallthru
          _
        %p187 = scmp.lt.s32.totalorder %s19, 1
        %s188 = scalar_select %p187, %s19, 1
        %s189 = smul.addr %s188, 4
        %s190 = scalar_lea.vmem %s0, %s189
        %p191 = pneg %p40
        %p192 = pneg %p37
        %p193 = pneg %p61
        %p194 = pneg %p58
        %p195 = pneg %p82
        %p196 = pneg %p79
        %p197 = pneg %p103
        %p198 = pneg %p100
        %p199 = pneg %p129
        %p200 = pneg %p126
        %s201 = sand.u32 %s116, 1
        %s202 = scalar_lea.sflag [#allocation4], %s201
        %s203 = sand.u32 %s116, 1
        %s204 = smul.addr %s203, 16
        %s205 = scalar_lea.vmem [#allocation5], %s204
        %p206 = scmp.lt.s32.totalorder %s19, 1
        %s207 = scalar_select %p206, %s19, 1
        %s208 = smul.addr %s207, 4
        %s209 = scalar_lea.vmem %s0, %s208
        %v211 = vld [vmem:[%s209] sm:$0xf]
        %v212 = vunpack.c.l.bf16 %v211
        %vm213 = vcmp.ge.f32.partialorder %v212, 0.0
        %v214 = vmul.f32 %v212, 0.01
        %v215 = vsel %vm213, %v212, %v214
        %v216 = vlaneseq
        %v217 = vand.u32 %v216, 127
        %vm218 = vcmp.ge.s32.totalorder %v217, 1
        %vm219 = vcmp.le.s32.totalorder %v217, 16
        %vm220 = vmand %vm218, %vm219
        %vm221 = vcmp.ge.s32.totalorder %v217, 0
        %vm222 = vcmp.le.s32.totalorder %v217, 15
        %vm223 = vmand %vm221, %vm222
        %v224 = vld [vmem:[%s3] sm:$0xff]
        %226 = vset.pattern.permute.xlu0 0
        %227 = vperm.xlu0 %226, %v224
        %v228 = vpop.permute.xlu0 %227
        %v230 = vadd.f32 %v228, 0.0
        %v231 = vld [vmem:[%s1] sm:$0xf]
        %v232 = vpack.c.bf16 %v215, %v215
        %vm233 = vcmask 64512
        %v235 = vsel %vm233, %v231, 0
        %vm237 = vcmask 1043456
        %v239 = vsel %vm237, %v232, 0
        %241 = vmatpush.bf16.msra.mxu0 0
        %242 = vmatpush.bf16.msra.mxu0 0
        %243 = vmatpush.bf16.msra.mxu0 0
        %244 = vmatpush.bf16.msra.mxu0 0
        %245 = vmatpush.bf16.msra.mxu0 0
        %246 = vmatpush.bf16.msra.mxu0 0
        %247 = vmatpush.bf16.msra.mxu0 0
        %248 = vmatpush.bf16.msra.mxu0 %v239
        %249 = vmatmul.bf16.gmra.mxu0 %v235
        %v250 = vpop.f32.mrf.mxu0
        %v251 = vadd.f32 0.0, %v250
        %v252 = vpop.f32.mrf.mxu0
        %253 = vdwg.mxu0
        %v254 = vadd.f32 %v230, %v251
        %s255 = scalar_lea.vmem %s1, 8
        %v256 = vld [vmem:[%s255] sm:$0xf]
        %257 = vrot.lane.b32.xlu0 %v215, 1
        %v258 = vpop.permute.xlu0 %257
        %v259 = vsel %vm218, %v258, 0.0
        %v260 = vpack.c.bf16 %v259, %v259
        %v262 = vsel %vm233, %v256, 0
        %v265 = vsel %vm237, %v260, 0
        %267 = vmatpush.bf16.msra.mxu0 0
        %268 = vmatpush.bf16.msra.mxu0 0
        %269 = vmatpush.bf16.msra.mxu0 0
        %270 = vmatpush.bf16.msra.mxu0 0
        %271 = vmatpush.bf16.msra.mxu0 0
        %272 = vmatpush.bf16.msra.mxu0 0
        %273 = vmatpush.bf16.msra.mxu0 0
        %274 = vmatpush.bf16.msra.mxu0 %v265
        %275 = vmatmul.bf16.gmra.mxu0 %v262
        %v276 = vpop.f32.mrf.mxu0
        %v277 = vadd.f32 0.0, %v276
        %v278 = vpop.f32.mrf.mxu0
        %279 = vdwg.mxu0
        %v280 = vadd.f32 %v254, %v277
        %v281 = vsel %vm220, %v280, 0.0
        %s282 = scalar_lea.vmem %s1, 4
        %v283 = vld [vmem:[%s282] sm:$0xf]
        %v285 = vsel %vm233, %v283, 0
        %287 = vmatpush.bf16.msra.mxu0 0
        %288 = vmatpush.bf16.msra.mxu0 0
        %289 = vmatpush.bf16.msra.mxu0 0
        %290 = vmatpush.bf16.msra.mxu0 0
        %291 = vmatpush.bf16.msra.mxu0 0
        %292 = vmatpush.bf16.msra.mxu0 0
        %293 = vmatpush.bf16.msra.mxu0 0
        %294 = vmatpush.bf16.msra.mxu0 %v239
        %295 = vmatmul.bf16.gmra.mxu0 %v285
        %v296 = vpop.f32.mrf.mxu0
        %v297 = vadd.f32 0.0, %v296
        %v298 = vpop.f32.mrf.mxu0
        %299 = vdwg.mxu0
        %v300 = vadd.f32 %v230, %v297
        %s301 = scalar_lea.vmem %s1, 12
        %v302 = vld [vmem:[%s301] sm:$0xf]
        %v304 = vsel %vm233, %v302, 0
        %306 = vmatpush.bf16.msra.mxu0 0
        %307 = vmatpush.bf16.msra.mxu0 0
        %308 = vmatpush.bf16.msra.mxu0 0
        %309 = vmatpush.bf16.msra.mxu0 0
        %310 = vmatpush.bf16.msra.mxu0 0
        %311 = vmatpush.bf16.msra.mxu0 0
        %312 = vmatpush.bf16.msra.mxu0 0
        %313 = vmatpush.bf16.msra.mxu0 %v265
        %314 = vmatmul.bf16.gmra.mxu0 %v304
        %v315 = vpop.f32.mrf.mxu0
        %v316 = vadd.f32 0.0, %v315
        %v317 = vpop.f32.mrf.mxu0
        %318 = vdwg.mxu0
        %v319 = vadd.f32 %v300, %v316
        %v320 = vsel %vm223, %v319, 0.0
        %vm321 = vcmp.ge.f32.partialorder %v281, 0.0
        %v322 = vmul.f32 %v281, 0.01
        %v323 = vsel %vm321, %v281, %v322
        %vm324 = vcmp.ge.f32.partialorder %v320, 0.0
        %v325 = vmul.f32 %v320, 0.01
        %v326 = vsel %vm324, %v320, %v325
        %s327 = scalar_lea.vmem %s3, 8
        %v328 = vld [vmem:[%s327] sm:$0xff]
        %330 = vset.pattern.permute.xlu0 0
        %331 = vperm.xlu0 %330, %v328
        %v332 = vpop.permute.xlu0 %331
        %v334 = vadd.f32 %v332, 0.0
        %v335 = vld [vmem:[#allocation2] sm:$0xf]
        %336 = vrot.lane.b32.xlu0 %v326, 1
        %v337 = vpop.permute.xlu0 %336
        %v338 = vsel %vm218, %v337, 0.0
        %v339 = vpack.c.bf16 %v338, %v338
        %v341 = vsel %vm233, %v335, 0
        %v344 = vsel %vm237, %v339, 0
        %346 = vmatpush.bf16.msra.mxu0 0
        %347 = vmatpush.bf16.msra.mxu0 0
        %348 = vmatpush.bf16.msra.mxu0 0
        %349 = vmatpush.bf16.msra.mxu0 0
        %350 = vmatpush.bf16.msra.mxu0 0
        %351 = vmatpush.bf16.msra.mxu0 0
        %352 = vmatpush.bf16.msra.mxu0 0
        %353 = vmatpush.bf16.msra.mxu0 %v344
        %354 = vmatmul.bf16.gmra.mxu0 %v341
        %v355 = vpop.f32.mrf.mxu0
        %v356 = vadd.f32 0.0, %v355
        %v357 = vpop.f32.mrf.mxu0
        %358 = vdwg.mxu0
        %v359 = vadd.f32 %v334, %v356
        %s360 = scalar_lea.vmem [#allocation2], 4
        %v361 = vld [vmem:[%s360] sm:$0xf]
        %v362 = vpack.c.bf16 %v323, %v323
        %v364 = vsel %vm233, %v361, 0
        %v367 = vsel %vm237, %v362, 0
        %369 = vmatpush.bf16.msra.mxu0 0
        %370 = vmatpush.bf16.msra.mxu0 0
        %371 = vmatpush.bf16.msra.mxu0 0
        %372 = vmatpush.bf16.msra.mxu0 0
        %373 = vmatpush.bf16.msra.mxu0 0
        %374 = vmatpush.bf16.msra.mxu0 0
        %375 = vmatpush.bf16.msra.mxu0 0
        %376 = vmatpush.bf16.msra.mxu0 %v367
        %377 = vmatmul.bf16.gmra.mxu0 %v364
        %v378 = vpop.f32.mrf.mxu0
        %v379 = vadd.f32 0.0, %v378
        %v380 = vpop.f32.mrf.mxu0
        %381 = vdwg.mxu0
        %v382 = vadd.f32 %v359, %v379
        %s383 = scalar_lea.vmem [#allocation2], 8
        %v384 = vld [vmem:[%s383] sm:$0xf]
        %v385 = vpack.c.bf16 %v326, %v326
        %v387 = vsel %vm233, %v384, 0
        %v390 = vsel %vm237, %v385, 0
        %392 = vmatpush.bf16.msra.mxu0 0
        %393 = vmatpush.bf16.msra.mxu0 0
        %394 = vmatpush.bf16.msra.mxu0 0
        %395 = vmatpush.bf16.msra.mxu0 0
        %396 = vmatpush.bf16.msra.mxu0 0
        %397 = vmatpush.bf16.msra.mxu0 0
        %398 = vmatpush.bf16.msra.mxu0 0
        %399 = vmatpush.bf16.msra.mxu0 %v390
        %400 = vmatmul.bf16.gmra.mxu0 %v387
        %v401 = vpop.f32.mrf.mxu0
        %v402 = vadd.f32 0.0, %v401
        %v403 = vpop.f32.mrf.mxu0
        %404 = vdwg.mxu0
        %v405 = vadd.f32 %v382, %v402
        %v406 = vsel %vm220, %v405, 0.0
        %407 = vmatpush.bf16.msra.mxu0 0
        %408 = vmatpush.bf16.msra.mxu0 0
        %409 = vmatpush.bf16.msra.mxu0 0
        %410 = vmatpush.bf16.msra.mxu0 0
        %411 = vmatpush.bf16.msra.mxu0 0
        %412 = vmatpush.bf16.msra.mxu0 0
        %413 = vmatpush.bf16.msra.mxu0 0
        %414 = vmatpush.bf16.msra.mxu0 %v367
        %415 = vmatmul.bf16.gmra.mxu0 %v341
        %v416 = vpop.f32.mrf.mxu0
        %v417 = vadd.f32 0.0, %v416
        %v418 = vpop.f32.mrf.mxu0
        %419 = vdwg.mxu0
        %v420 = vadd.f32 %v334, %v417
        %421 = vmatpush.bf16.msra.mxu0 0
        %422 = vmatpush.bf16.msra.mxu0 0
        %423 = vmatpush.bf16.msra.mxu0 0
        %424 = vmatpush.bf16.msra.mxu0 0
        %425 = vmatpush.bf16.msra.mxu0 0
        %426 = vmatpush.bf16.msra.mxu0 0
        %427 = vmatpush.bf16.msra.mxu0 0
        %428 = vmatpush.bf16.msra.mxu0 %v390
        %429 = vmatmul.bf16.gmra.mxu0 %v364
        %v430 = vpop.f32.mrf.mxu0
        %v431 = vadd.f32 0.0, %v430
        %v432 = vpop.f32.mrf.mxu0
        %433 = vdwg.mxu0
        %v434 = vadd.f32 %v420, %v431
        %435 = vrot.lane.b32.xlu0 %v323, 127
        %v436 = vpop.permute.xlu0 %435
        %vm437 = vcmp.lt.s32.totalorder %v217, 127
        %v438 = vsel %vm437, %v436, 0.0
        %v439 = vpack.c.bf16 %v438, %v438
        %v441 = vsel %vm237, %v439, 0
        %443 = vmatpush.bf16.msra.mxu0 0
        %444 = vmatpush.bf16.msra.mxu0 0
        %445 = vmatpush.bf16.msra.mxu0 0
        %446 = vmatpush.bf16.msra.mxu0 0
        %447 = vmatpush.bf16.msra.mxu0 0
        %448 = vmatpush.bf16.msra.mxu0 0
        %449 = vmatpush.bf16.msra.mxu0 0
        %450 = vmatpush.bf16.msra.mxu0 %v441
        %451 = vmatmul.bf16.gmra.mxu0 %v387
        %v452 = vpop.f32.mrf.mxu0
        %v453 = vadd.f32 0.0, %v452
        %v454 = vpop.f32.mrf.mxu0
        %455 = vdwg.mxu0
        %v456 = vadd.f32 %v434, %v453
        %v457 = vsel %vm223, %v456, 0.0
        %vm458 = vcmp.ge.f32.partialorder %v406, 0.0
        %v459 = vmul.f32 %v406, 0.01
        %v460 = vsel %vm458, %v406, %v459
        %vm461 = vcmp.ge.f32.partialorder %v457, 0.0
        %v462 = vmul.f32 %v457, 0.01
        %v463 = vsel %vm461, %v457, %v462
        %s464 = scalar_lea.vmem %s3, 16
        %v465 = vld [vmem:[%s464] sm:$0xff]
        %467 = vset.pattern.permute.xlu0 0
        %468 = vperm.xlu0 %467, %v465
        %v469 = vpop.permute.xlu0 %468
        %v471 = vadd.f32 %v469, 0.0
        %s472 = scalar_lea.vmem [#allocation2], 12
        %v473 = vld [vmem:[%s472] sm:$0xf]
        %474 = vrot.lane.b32.xlu0 %v463, 1
        %v475 = vpop.permute.xlu0 %474
        %v476 = vsel %vm218, %v475, 0.0
        %v477 = vpack.c.bf16 %v476, %v476
        %v479 = vsel %vm233, %v473, 0
        %v482 = vsel %vm237, %v477, 0
        %484 = vmatpush.bf16.msra.mxu0 0
        %485 = vmatpush.bf16.msra.mxu0 0
        %486 = vmatpush.bf16.msra.mxu0 0
        %487 = vmatpush.bf16.msra.mxu0 0
        %488 = vmatpush.bf16.msra.mxu0 0
        %489 = vmatpush.bf16.msra.mxu0 0
        %490 = vmatpush.bf16.msra.mxu0 0
        %491 = vmatpush.bf16.msra.mxu0 %v482
        %492 = vmatmul.bf16.gmra.mxu0 %v479
        %v493 = vpop.f32.mrf.mxu0
        %v494 = vadd.f32 0.0, %v493
        %v495 = vpop.f32.mrf.mxu0
        %496 = vdwg.mxu0
        %v497 = vadd.f32 %v471, %v494
        %s498 = scalar_lea.vmem [#allocation2], 16
        %v499 = vld [vmem:[%s498] sm:$0xf]
        %v500 = vpack.c.bf16 %v460, %v460
        %v502 = vsel %vm233, %v499, 0
        %v505 = vsel %vm237, %v500, 0
        %507 = vmatpush.bf16.msra.mxu0 0
        %508 = vmatpush.bf16.msra.mxu0 0
        %509 = vmatpush.bf16.msra.mxu0 0
        %510 = vmatpush.bf16.msra.mxu0 0
        %511 = vmatpush.bf16.msra.mxu0 0
        %512 = vmatpush.bf16.msra.mxu0 0
        %513 = vmatpush.bf16.msra.mxu0 0
        %514 = vmatpush.bf16.msra.mxu0 %v505
        %515 = vmatmul.bf16.gmra.mxu0 %v502
        %v516 = vpop.f32.mrf.mxu0
        %v517 = vadd.f32 0.0, %v516
        %v518 = vpop.f32.mrf.mxu0
        %519 = vdwg.mxu0
        %v520 = vadd.f32 %v497, %v517
        %s521 = scalar_lea.vmem [#allocation2], 20
        %v522 = vld [vmem:[%s521] sm:$0xf]
        %v523 = vpack.c.bf16 %v463, %v463
        %v525 = vsel %vm233, %v522, 0
        %v528 = vsel %vm237, %v523, 0
        %530 = vmatpush.bf16.msra.mxu0 0
        %531 = vmatpush.bf16.msra.mxu0 0
        %532 = vmatpush.bf16.msra.mxu0 0
        %533 = vmatpush.bf16.msra.mxu0 0
        %534 = vmatpush.bf16.msra.mxu0 0
        %535 = vmatpush.bf16.msra.mxu0 0
        %536 = vmatpush.bf16.msra.mxu0 0
        %537 = vmatpush.bf16.msra.mxu0 %v528
        %538 = vmatmul.bf16.gmra.mxu0 %v525
        %v539 = vpop.f32.mrf.mxu0
        %v540 = vadd.f32 0.0, %v539
        %v541 = vpop.f32.mrf.mxu0
        %542 = vdwg.mxu0
        %v543 = vadd.f32 %v520, %v540
        %v544 = vsel %vm220, %v543, 0.0
        %545 = vmatpush.bf16.msra.mxu0 0
        %546 = vmatpush.bf16.msra.mxu0 0
        %547 = vmatpush.bf16.msra.mxu0 0
        %548 = vmatpush.bf16.msra.mxu0 0
        %549 = vmatpush.bf16.msra.mxu0 0
        %550 = vmatpush.bf16.msra.mxu0 0
        %551 = vmatpush.bf16.msra.mxu0 0
        %552 = vmatpush.bf16.msra.mxu0 %v505
        %553 = vmatmul.bf16.gmra.mxu0 %v479
        %v554 = vpop.f32.mrf.mxu0
        %v555 = vadd.f32 0.0, %v554
        %v556 = vpop.f32.mrf.mxu0
        %557 = vdwg.mxu0
        %v558 = vadd.f32 %v471, %v555
        %559 = vmatpush.bf16.msra.mxu0 0
        %560 = vmatpush.bf16.msra.mxu0 0
        %561 = vmatpush.bf16.msra.mxu0 0
        %562 = vmatpush.bf16.msra.mxu0 0
        %563 = vmatpush.bf16.msra.mxu0 0
        %564 = vmatpush.bf16.msra.mxu0 0
        %565 = vmatpush.bf16.msra.mxu0 0
        %566 = vmatpush.bf16.msra.mxu0 %v528
        %567 = vmatmul.bf16.gmra.mxu0 %v502
        %v568 = vpop.f32.mrf.mxu0
        %v569 = vadd.f32 0.0, %v568
        %v570 = vpop.f32.mrf.mxu0
        %571 = vdwg.mxu0
        %v572 = vadd.f32 %v558, %v569
        %573 = vrot.lane.b32.xlu0 %v460, 127
        %v574 = vpop.permute.xlu0 %573
        %v575 = vsel %vm437, %v574, 0.0
        %v576 = vpack.c.bf16 %v575, %v575
        %v578 = vsel %vm237, %v576, 0
        %580 = vmatpush.bf16.msra.mxu0 0
        %581 = vmatpush.bf16.msra.mxu0 0
        %582 = vmatpush.bf16.msra.mxu0 0
        %583 = vmatpush.bf16.msra.mxu0 0
        %584 = vmatpush.bf16.msra.mxu0 0
        %585 = vmatpush.bf16.msra.mxu0 0
        %586 = vmatpush.bf16.msra.mxu0 0
        %587 = vmatpush.bf16.msra.mxu0 %v578
        %588 = vmatmul.bf16.gmra.mxu0 %v525
        %v589 = vpop.f32.mrf.mxu0
        %v590 = vadd.f32 0.0, %v589
        %v591 = vpop.f32.mrf.mxu0
        %592 = vdwg.mxu0
        %v593 = vadd.f32 %v572, %v590
        %v594 = vsel %vm223, %v593, 0.0
        %v595 = vadd.f32 %v281, %v544
        %v596 = vadd.f32 %v320, %v594
        %vm597 = vcmp.ge.f32.partialorder %v595, 0.0
        %v598 = vmul.f32 %v595, 0.01
        %v599 = vsel %vm597, %v595, %v598
        %vm600 = vcmp.ge.f32.partialorder %v596, 0.0
        %v601 = vmul.f32 %v596, 0.01
        %v602 = vsel %vm600, %v596, %v601
        %s603 = scalar_lea.vmem %s3, 24
        %v604 = vld [vmem:[%s603] sm:$0xff]
        %606 = vset.pattern.permute.xlu0 0
        %607 = vperm.xlu0 %606, %v604
        %v608 = vpop.permute.xlu0 %607
        %v610 = vadd.f32 %v608, 0.0
        %s611 = scalar_lea.vmem [#allocation2], 24
        %v612 = vld [vmem:[%s611] sm:$0xf]
        %613 = vrot.lane.b32.xlu0 %v602, 2
        %v614 = vpop.permute.xlu0 %613
        %vm615 = vcmp.ge.s32.totalorder %v217, 2
        %v616 = vsel %vm615, %v614, 0.0
        %v617 = vpack.c.bf16 %v616, %v616
        %v619 = vsel %vm233, %v612, 0
        %v622 = vsel %vm237, %v617, 0
        %624 = vmatpush.bf16.msra.mxu0 0
        %625 = vmatpush.bf16.msra.mxu0 0
        %626 = vmatpush.bf16.msra.mxu0 0
        %627 = vmatpush.bf16.msra.mxu0 0
        %628 = vmatpush.bf16.msra.mxu0 0
        %629 = vmatpush.bf16.msra.mxu0 0
        %630 = vmatpush.bf16.msra.mxu0 0
        %631 = vmatpush.bf16.msra.mxu0 %v622
        %632 = vmatmul.bf16.gmra.mxu0 %v619
        %v633 = vpop.f32.mrf.mxu0
        %v634 = vadd.f32 0.0, %v633
        %v635 = vpop.f32.mrf.mxu0
        %636 = vdwg.mxu0
        %v637 = vadd.f32 %v610, %v634
        %s638 = scalar_lea.vmem [#allocation2], 28
        %v639 = vld [vmem:[%s638] sm:$0xf]
        %v640 = vpack.c.bf16 %v599, %v599
        %v642 = vsel %vm233, %v639, 0
        %v645 = vsel %vm237, %v640, 0
        %647 = vmatpush.bf16.msra.mxu0 0
        %648 = vmatpush.bf16.msra.mxu0 0
        %649 = vmatpush.bf16.msra.mxu0 0
        %650 = vmatpush.bf16.msra.mxu0 0
        %651 = vmatpush.bf16.msra.mxu0 0
        %652 = vmatpush.bf16.msra.mxu0 0
        %653 = vmatpush.bf16.msra.mxu0 0
        %654 = vmatpush.bf16.msra.mxu0 %v645
        %655 = vmatmul.bf16.gmra.mxu0 %v642
        %v656 = vpop.f32.mrf.mxu0
        %v657 = vadd.f32 0.0, %v656
        %v658 = vpop.f32.mrf.mxu0
        %659 = vdwg.mxu0
        %v660 = vadd.f32 %v637, %v657
        %s661 = scalar_lea.vmem [#allocation2], 32
        %v662 = vld [vmem:[%s661] sm:$0xf]
        %663 = vrot.lane.b32.xlu0 %v602, 127
        %v664 = vpop.permute.xlu0 %663
        %v665 = vsel %vm437, %v664, 0.0
        %v666 = vpack.c.bf16 %v665, %v665
        %v668 = vsel %vm233, %v662, 0
        %v671 = vsel %vm237, %v666, 0
        %673 = vmatpush.bf16.msra.mxu0 0
        %674 = vmatpush.bf16.msra.mxu0 0
        %675 = vmatpush.bf16.msra.mxu0 0
        %676 = vmatpush.bf16.msra.mxu0 0
        %677 = vmatpush.bf16.msra.mxu0 0
        %678 = vmatpush.bf16.msra.mxu0 0
        %679 = vmatpush.bf16.msra.mxu0 0
        %680 = vmatpush.bf16.msra.mxu0 %v671
        %681 = vmatmul.bf16.gmra.mxu0 %v668
        %v682 = vpop.f32.mrf.mxu0
        %v683 = vadd.f32 0.0, %v682
        %v684 = vpop.f32.mrf.mxu0
        %685 = vdwg.mxu0
        %v686 = vadd.f32 %v660, %v683
        %v687 = vsel %vm220, %v686, 0.0
        %688 = vrot.lane.b32.xlu0 %v599, 1
        %v689 = vpop.permute.xlu0 %688
        %v690 = vsel %vm218, %v689, 0.0
        %v691 = vpack.c.bf16 %v690, %v690
        %v693 = vsel %vm237, %v691, 0
        %695 = vmatpush.bf16.msra.mxu0 0
        %696 = vmatpush.bf16.msra.mxu0 0
        %697 = vmatpush.bf16.msra.mxu0 0
        %698 = vmatpush.bf16.msra.mxu0 0
        %699 = vmatpush.bf16.msra.mxu0 0
        %700 = vmatpush.bf16.msra.mxu0 0
        %701 = vmatpush.bf16.msra.mxu0 0
        %702 = vmatpush.bf16.msra.mxu0 %v693
        %703 = vmatmul.bf16.gmra.mxu0 %v619
        %v704 = vpop.f32.mrf.mxu0
        %v705 = vadd.f32 0.0, %v704
        %v706 = vpop.f32.mrf.mxu0
        %707 = vdwg.mxu0
        %v708 = vadd.f32 %v610, %v705
        %v709 = vpack.c.bf16 %v602, %v602
        %v711 = vsel %vm237, %v709, 0
        %713 = vmatpush.bf16.msra.mxu0 0
        %714 = vmatpush.bf16.msra.mxu0 0
        %715 = vmatpush.bf16.msra.mxu0 0
        %716 = vmatpush.bf16.msra.mxu0 0
        %717 = vmatpush.bf16.msra.mxu0 0
        %718 = vmatpush.bf16.msra.mxu0 0
        %719 = vmatpush.bf16.msra.mxu0 0
        %720 = vmatpush.bf16.msra.mxu0 %v711
        %721 = vmatmul.bf16.gmra.mxu0 %v642
        %v722 = vpop.f32.mrf.mxu0
        %v723 = vadd.f32 0.0, %v722
        %v724 = vpop.f32.mrf.mxu0
        %725 = vdwg.mxu0
        %v726 = vadd.f32 %v708, %v723
        %727 = vrot.lane.b32.xlu0 %v599, 126
        %v728 = vpop.permute.xlu0 %727
        %vm729 = vcmp.lt.s32.totalorder %v217, 126
        %v730 = vsel %vm729, %v728, 0.0
        %v731 = vpack.c.bf16 %v730, %v730
        %v733 = vsel %vm237, %v731, 0
        %735 = vmatpush.bf16.msra.mxu0 0
        %736 = vmatpush.bf16.msra.mxu0 0
        %737 = vmatpush.bf16.msra.mxu0 0
        %738 = vmatpush.bf16.msra.mxu0 0
        %739 = vmatpush.bf16.msra.mxu0 0
        %740 = vmatpush.bf16.msra.mxu0 0
        %741 = vmatpush.bf16.msra.mxu0 0
        %742 = vmatpush.bf16.msra.mxu0 %v733
        %743 = vmatmul.bf16.gmra.mxu0 %v668
        %v744 = vpop.f32.mrf.mxu0
        %v745 = vadd.f32 0.0, %v744
        %v746 = vpop.f32.mrf.mxu0
        %747 = vdwg.mxu0
        %v748 = vadd.f32 %v726, %v745
        %v749 = vsel %vm223, %v748, 0.0
        %vm750 = vcmp.ge.f32.partialorder %v687, 0.0
        %v751 = vmul.f32 %v687, 0.01
        %v752 = vsel %vm750, %v687, %v751
        %vm753 = vcmp.ge.f32.partialorder %v749, 0.0
        %v754 = vmul.f32 %v749, 0.01
        %v755 = vsel %vm753, %v749, %v754
        %s756 = scalar_lea.vmem %s3, 32
        %v757 = vld [vmem:[%s756] sm:$0xff]
        %759 = vset.pattern.permute.xlu0 0
        %760 = vperm.xlu0 %759, %v757
        %v761 = vpop.permute.xlu0 %760
        %v763 = vadd.f32 %v761, 0.0
        %s764 = scalar_lea.vmem [#allocation2], 36
        %v765 = vld [vmem:[%s764] sm:$0xf]
        %766 = vrot.lane.b32.xlu0 %v755, 1
        %v767 = vpop.permute.xlu0 %766
        %v768 = vsel %vm218, %v767, 0.0
        %v769 = vpack.c.bf16 %v768, %v768
        %v771 = vsel %vm233, %v765, 0
        %v774 = vsel %vm237, %v769, 0
        %776 = vmatpush.bf16.msra.mxu0 0
        %777 = vmatpush.bf16.msra.mxu0 0
        %778 = vmatpush.bf16.msra.mxu0 0
        %779 = vmatpush.bf16.msra.mxu0 0
        %780 = vmatpush.bf16.msra.mxu0 0
        %781 = vmatpush.bf16.msra.mxu0 0
        %782 = vmatpush.bf16.msra.mxu0 0
        %783 = vmatpush.bf16.msra.mxu0 %v774
        %784 = vmatmul.bf16.gmra.mxu0 %v771
        %v785 = vpop.f32.mrf.mxu0
        %v786 = vadd.f32 0.0, %v785
        %v787 = vpop.f32.mrf.mxu0
        %788 = vdwg.mxu0
        %v789 = vadd.f32 %v763, %v786
        %s790 = scalar_lea.vmem [#allocation2], 40
        %v791 = vld [vmem:[%s790] sm:$0xf]
        %v792 = vpack.c.bf16 %v752, %v752
        %v794 = vsel %vm233, %v791, 0
        %v797 = vsel %vm237, %v792, 0
        %799 = vmatpush.bf16.msra.mxu0 0
        %800 = vmatpush.bf16.msra.mxu0 0
        %801 = vmatpush.bf16.msra.mxu0 0
        %802 = vmatpush.bf16.msra.mxu0 0
        %803 = vmatpush.bf16.msra.mxu0 0
        %804 = vmatpush.bf16.msra.mxu0 0
        %805 = vmatpush.bf16.msra.mxu0 0
        %806 = vmatpush.bf16.msra.mxu0 %v797
        %807 = vmatmul.bf16.gmra.mxu0 %v794
        %v808 = vpop.f32.mrf.mxu0
        %v809 = vadd.f32 0.0, %v808
        %v810 = vpop.f32.mrf.mxu0
        %811 = vdwg.mxu0
        %v812 = vadd.f32 %v789, %v809
        %s813 = scalar_lea.vmem [#allocation2], 44
        %v814 = vld [vmem:[%s813] sm:$0xf]
        %v815 = vpack.c.bf16 %v755, %v755
        %v817 = vsel %vm233, %v814, 0
        %v820 = vsel %vm237, %v815, 0
        %822 = vmatpush.bf16.msra.mxu0 0
        %823 = vmatpush.bf16.msra.mxu0 0
        %824 = vmatpush.bf16.msra.mxu0 0
        %825 = vmatpush.bf16.msra.mxu0 0
        %826 = vmatpush.bf16.msra.mxu0 0
        %827 = vmatpush.bf16.msra.mxu0 0
        %828 = vmatpush.bf16.msra.mxu0 0
        %829 = vmatpush.bf16.msra.mxu0 %v820
        %830 = vmatmul.bf16.gmra.mxu0 %v817
        %v831 = vpop.f32.mrf.mxu0
        %v832 = vadd.f32 0.0, %v831
        %v833 = vpop.f32.mrf.mxu0
        %834 = vdwg.mxu0
        %v835 = vadd.f32 %v812, %v832
        %v836 = vsel %vm220, %v835, 0.0
        %837 = vmatpush.bf16.msra.mxu0 0
        %838 = vmatpush.bf16.msra.mxu0 0
        %839 = vmatpush.bf16.msra.mxu0 0
        %840 = vmatpush.bf16.msra.mxu0 0
        %841 = vmatpush.bf16.msra.mxu0 0
        %842 = vmatpush.bf16.msra.mxu0 0
        %843 = vmatpush.bf16.msra.mxu0 0
        %844 = vmatpush.bf16.msra.mxu0 %v797
        %845 = vmatmul.bf16.gmra.mxu0 %v771
        %v846 = vpop.f32.mrf.mxu0
        %v847 = vadd.f32 0.0, %v846
        %v848 = vpop.f32.mrf.mxu0
        %849 = vdwg.mxu0
        %v850 = vadd.f32 %v763, %v847
        %851 = vmatpush.bf16.msra.mxu0 0
        %852 = vmatpush.bf16.msra.mxu0 0
        %853 = vmatpush.bf16.msra.mxu0 0
        %854 = vmatpush.bf16.msra.mxu0 0
        %855 = vmatpush.bf16.msra.mxu0 0
        %856 = vmatpush.bf16.msra.mxu0 0
        %857 = vmatpush.bf16.msra.mxu0 0
        %858 = vmatpush.bf16.msra.mxu0 %v820
        %859 = vmatmul.bf16.gmra.mxu0 %v794
        %v860 = vpop.f32.mrf.mxu0
        %v861 = vadd.f32 0.0, %v860
        %v862 = vpop.f32.mrf.mxu0
        %863 = vdwg.mxu0
        %v864 = vadd.f32 %v850, %v861
        %865 = vrot.lane.b32.xlu0 %v752, 127
        %v866 = vpop.permute.xlu0 %865
        %v867 = vsel %vm437, %v866, 0.0
        %v868 = vpack.c.bf16 %v867, %v867
        %v870 = vsel %vm237, %v868, 0
        %872 = vmatpush.bf16.msra.mxu0 0
        %873 = vmatpush.bf16.msra.mxu0 0
        %874 = vmatpush.bf16.msra.mxu0 0
        %875 = vmatpush.bf16.msra.mxu0 0
        %876 = vmatpush.bf16.msra.mxu0 0
        %877 = vmatpush.bf16.msra.mxu0 0
        %878 = vmatpush.bf16.msra.mxu0 0
        %879 = vmatpush.bf16.msra.mxu0 %v870
        %880 = vmatmul.bf16.gmra.mxu0 %v817
        %v881 = vpop.f32.mrf.mxu0
        %v882 = vadd.f32 0.0, %v881
        %v883 = vpop.f32.mrf.mxu0
        %884 = vdwg.mxu0
        %v885 = vadd.f32 %v864, %v882
        %v886 = vsel %vm223, %v885, 0.0
        %v887 = vadd.f32 %v595, %v836
        %v888 = vadd.f32 %v596, %v886
        %vm889 = vcmp.ge.f32.partialorder %v887, 0.0
        %v890 = vmul.f32 %v887, 0.01
        %v891 = vsel %vm889, %v887, %v890
        %vm892 = vcmp.ge.f32.partialorder %v888, 0.0
        %v893 = vmul.f32 %v888, 0.01
        %v894 = vsel %vm892, %v888, %v893
        %s895 = scalar_lea.vmem %s3, 40
        %v896 = vld [vmem:[%s895] sm:$0xff]
        %898 = vset.pattern.permute.xlu0 0
        %899 = vperm.xlu0 %898, %v896
        %v900 = vpop.permute.xlu0 %899
        %v902 = vadd.f32 %v900, 0.0
        %s903 = scalar_lea.vmem [#allocation2], 48
        %v904 = vld [vmem:[%s903] sm:$0xf]
        %905 = vrot.lane.b32.xlu0 %v894, 5
        %v906 = vpop.permute.xlu0 %905
        %vm907 = vcmp.ge.s32.totalorder %v217, 5
        %v908 = vsel %vm907, %v906, 0.0
        %v909 = vpack.c.bf16 %v908, %v908
        %v911 = vsel %vm233, %v904, 0
        %v914 = vsel %vm237, %v909, 0
        %916 = vmatpush.bf16.msra.mxu0 0
        %917 = vmatpush.bf16.msra.mxu0 0
        %918 = vmatpush.bf16.msra.mxu0 0
        %919 = vmatpush.bf16.msra.mxu0 0
        %920 = vmatpush.bf16.msra.mxu0 0
        %921 = vmatpush.bf16.msra.mxu0 0
        %922 = vmatpush.bf16.msra.mxu0 0
        %923 = vmatpush.bf16.msra.mxu0 %v914
        %924 = vmatmul.bf16.gmra.mxu0 %v911
        %v925 = vpop.f32.mrf.mxu0
        %v926 = vadd.f32 0.0, %v925
        %v927 = vpop.f32.mrf.mxu0
        %928 = vdwg.mxu0
        %v929 = vadd.f32 %v902, %v926
        %s930 = scalar_lea.vmem [#allocation2], 52
        %v931 = vld [vmem:[%s930] sm:$0xf]
        %v932 = vpack.c.bf16 %v891, %v891
        %v934 = vsel %vm233, %v931, 0
        %v937 = vsel %vm237, %v932, 0
        %939 = vmatpush.bf16.msra.mxu0 0
        %940 = vmatpush.bf16.msra.mxu0 0
        %941 = vmatpush.bf16.msra.mxu0 0
        %942 = vmatpush.bf16.msra.mxu0 0
        %943 = vmatpush.bf16.msra.mxu0 0
        %944 = vmatpush.bf16.msra.mxu0 0
        %945 = vmatpush.bf16.msra.mxu0 0
        %946 = vmatpush.bf16.msra.mxu0 %v937
        %947 = vmatmul.bf16.gmra.mxu0 %v934
        %v948 = vpop.f32.mrf.mxu0
        %v949 = vadd.f32 0.0, %v948
        %v950 = vpop.f32.mrf.mxu0
        %951 = vdwg.mxu0
        %v952 = vadd.f32 %v929, %v949
        %s953 = scalar_lea.vmem [#allocation2], 56
        %v954 = vld [vmem:[%s953] sm:$0xf]
        %955 = vrot.lane.b32.xlu0 %v894, 124
        %v956 = vpop.permute.xlu0 %955
        %vm957 = vcmp.lt.s32.totalorder %v217, 124
        %v958 = vsel %vm957, %v956, 0.0
        %v959 = vpack.c.bf16 %v958, %v958
        %v961 = vsel %vm233, %v954, 0
        %v964 = vsel %vm237, %v959, 0
        %966 = vmatpush.bf16.msra.mxu0 0
        %967 = vmatpush.bf16.msra.mxu0 0
        %968 = vmatpush.bf16.msra.mxu0 0
        %969 = vmatpush.bf16.msra.mxu0 0
        %970 = vmatpush.bf16.msra.mxu0 0
        %971 = vmatpush.bf16.msra.mxu0 0
        %972 = vmatpush.bf16.msra.mxu0 0
        %973 = vmatpush.bf16.msra.mxu0 %v964
        %974 = vmatmul.bf16.gmra.mxu0 %v961
        %v975 = vpop.f32.mrf.mxu0
        %v976 = vadd.f32 0.0, %v975
        %v977 = vpop.f32.mrf.mxu0
        %978 = vdwg.mxu0
        %v979 = vadd.f32 %v952, %v976
        %v980 = vsel %vm220, %v979, 0.0
        %981 = vrot.lane.b32.xlu0 %v891, 4
        %v982 = vpop.permute.xlu0 %981
        %vm983 = vcmp.ge.s32.totalorder %v217, 4
        %v984 = vsel %vm983, %v982, 0.0
        %v985 = vpack.c.bf16 %v984, %v984
        %v987 = vsel %vm237, %v985, 0
        %989 = vmatpush.bf16.msra.mxu0 0
        %990 = vmatpush.bf16.msra.mxu0 0
        %991 = vmatpush.bf16.msra.mxu0 0
        %992 = vmatpush.bf16.msra.mxu0 0
        %993 = vmatpush.bf16.msra.mxu0 0
        %994 = vmatpush.bf16.msra.mxu0 0
        %995 = vmatpush.bf16.msra.mxu0 0
        %996 = vmatpush.bf16.msra.mxu0 %v987
        %997 = vmatmul.bf16.gmra.mxu0 %v911
        %v998 = vpop.f32.mrf.mxu0
        %v999 = vadd.f32 0.0, %v998
        %v1000 = vpop.f32.mrf.mxu0
        %1001 = vdwg.mxu0
        %v1002 = vadd.f32 %v902, %v999
        %v1003 = vpack.c.bf16 %v894, %v894
        %v1005 = vsel %vm237, %v1003, 0
        %1007 = vmatpush.bf16.msra.mxu0 0
        %1008 = vmatpush.bf16.msra.mxu0 0
        %1009 = vmatpush.bf16.msra.mxu0 0
        %1010 = vmatpush.bf16.msra.mxu0 0
        %1011 = vmatpush.bf16.msra.mxu0 0
        %1012 = vmatpush.bf16.msra.mxu0 0
        %1013 = vmatpush.bf16.msra.mxu0 0
        %1014 = vmatpush.bf16.msra.mxu0 %v1005
        %1015 = vmatmul.bf16.gmra.mxu0 %v934
        %v1016 = vpop.f32.mrf.mxu0
        %v1017 = vadd.f32 0.0, %v1016
        %v1018 = vpop.f32.mrf.mxu0
        %1019 = vdwg.mxu0
        %v1020 = vadd.f32 %v1002, %v1017
        %1021 = vrot.lane.b32.xlu0 %v891, 123
        %v1022 = vpop.permute.xlu0 %1021
        %vm1023 = vcmp.lt.s32.totalorder %v217, 123
        %v1024 = vsel %vm1023, %v1022, 0.0
        %v1025 = vpack.c.bf16 %v1024, %v1024
        %v1027 = vsel %vm237, %v1025, 0
        %1029 = vmatpush.bf16.msra.mxu0 0
        %1030 = vmatpush.bf16.msra.mxu0 0
        %1031 = vmatpush.bf16.msra.mxu0 0
        %1032 = vmatpush.bf16.msra.mxu0 0
        %1033 = vmatpush.bf16.msra.mxu0 0
        %1034 = vmatpush.bf16.msra.mxu0 0
        %1035 = vmatpush.bf16.msra.mxu0 0
        %1036 = vmatpush.bf16.msra.mxu0 %v1027
        %1037 = vmatmul.bf16.gmra.mxu0 %v961
        %v1038 = vpop.f32.mrf.mxu0
        %v1039 = vadd.f32 0.0, %v1038
        %v1040 = vpop.f32.mrf.mxu0
        %1041 = vdwg.mxu0
        %v1042 = vadd.f32 %v1020, %v1039
        %v1043 = vsel %vm223, %v1042, 0.0
        %vm1044 = vcmp.ge.f32.partialorder %v980, 0.0
        %v1045 = vmul.f32 %v980, 0.01
        %v1046 = vsel %vm1044, %v980, %v1045
        %vm1047 = vcmp.ge.f32.partialorder %v1043, 0.0
        %v1048 = vmul.f32 %v1043, 0.01
        %v1049 = vsel %vm1047, %v1043, %v1048
        %s1050 = scalar_lea.vmem %s3, 48
        %v1051 = vld [vmem:[%s1050] sm:$0xff]
        %1053 = vset.pattern.permute.xlu0 0
        %1054 = vperm.xlu0 %1053, %v1051
        %v1055 = vpop.permute.xlu0 %1054
        %v1057 = vadd.f32 %v1055, 0.0
        %s1058 = scalar_lea.vmem [#allocation2], 60
        %v1059 = vld [vmem:[%s1058] sm:$0xf]
        %1060 = vrot.lane.b32.xlu0 %v1049, 1
        %v1061 = vpop.permute.xlu0 %1060
        %v1062 = vsel %vm218, %v1061, 0.0
        %v1063 = vpack.c.bf16 %v1062, %v1062
        %v1065 = vsel %vm233, %v1059, 0
        %v1068 = vsel %vm237, %v1063, 0
        %1070 = vmatpush.bf16.msra.mxu0 0
        %1071 = vmatpush.bf16.msra.mxu0 0
        %1072 = vmatpush.bf16.msra.mxu0 0
        %1073 = vmatpush.bf16.msra.mxu0 0
        %1074 = vmatpush.bf16.msra.mxu0 0
        %1075 = vmatpush.bf16.msra.mxu0 0
        %1076 = vmatpush.bf16.msra.mxu0 0
        %1077 = vmatpush.bf16.msra.mxu0 %v1068
        %1078 = vmatmul.bf16.gmra.mxu0 %v1065
        %v1079 = vpop.f32.mrf.mxu0
        %v1080 = vadd.f32 0.0, %v1079
        %v1081 = vpop.f32.mrf.mxu0
        %1082 = vdwg.mxu0
        %v1083 = vadd.f32 %v1057, %v1080
        %s1084 = scalar_lea.vmem [#allocation2], 64
        %v1085 = vld [vmem:[%s1084] sm:$0xf]
        %v1086 = vpack.c.bf16 %v1046, %v1046
        %v1088 = vsel %vm233, %v1085, 0
        %v1091 = vsel %vm237, %v1086, 0
        %1093 = vmatpush.bf16.msra.mxu0 0
        %1094 = vmatpush.bf16.msra.mxu0 0
        %1095 = vmatpush.bf16.msra.mxu0 0
        %1096 = vmatpush.bf16.msra.mxu0 0
        %1097 = vmatpush.bf16.msra.mxu0 0
        %1098 = vmatpush.bf16.msra.mxu0 0
        %1099 = vmatpush.bf16.msra.mxu0 0
        %1100 = vmatpush.bf16.msra.mxu0 %v1091
        %1101 = vmatmul.bf16.gmra.mxu0 %v1088
        %v1102 = vpop.f32.mrf.mxu0
        %v1103 = vadd.f32 0.0, %v1102
        %v1104 = vpop.f32.mrf.mxu0
        %1105 = vdwg.mxu0
        %v1106 = vadd.f32 %v1083, %v1103
        %s1107 = scalar_lea.vmem [#allocation2], 68
        %v1108 = vld [vmem:[%s1107] sm:$0xf]
        %v1109 = vpack.c.bf16 %v1049, %v1049
        %v1111 = vsel %vm233, %v1108, 0
        %v1114 = vsel %vm237, %v1109, 0
        %1116 = vmatpush.bf16.msra.mxu0 0
        %1117 = vmatpush.bf16.msra.mxu0 0
        %1118 = vmatpush.bf16.msra.mxu0 0
        %1119 = vmatpush.bf16.msra.mxu0 0
        %1120 = vmatpush.bf16.msra.mxu0 0
        %1121 = vmatpush.bf16.msra.mxu0 0
        %1122 = vmatpush.bf16.msra.mxu0 0
        %1123 = vmatpush.bf16.msra.mxu0 %v1114
        %1124 = vmatmul.bf16.gmra.mxu0 %v1111
        %v1125 = vpop.f32.mrf.mxu0
        %v1126 = vadd.f32 0.0, %v1125
        %v1127 = vpop.f32.mrf.mxu0
        %1128 = vdwg.mxu0
        %v1129 = vadd.f32 %v1106, %v1126
        %v1130 = vsel %vm220, %v1129, 0.0
        %1131 = vmatpush.bf16.msra.mxu0 0
        %1132 = vmatpush.bf16.msra.mxu0 0
        %1133 = vmatpush.bf16.msra.mxu0 0
        %1134 = vmatpush.bf16.msra.mxu0 0
        %1135 = vmatpush.bf16.msra.mxu0 0
        %1136 = vmatpush.bf16.msra.mxu0 0
        %1137 = vmatpush.bf16.msra.mxu0 0
        %1138 = vmatpush.bf16.msra.mxu0 %v1091
        %1139 = vmatmul.bf16.gmra.mxu0 %v1065
        %v1140 = vpop.f32.mrf.mxu0
        %v1141 = vadd.f32 0.0, %v1140
        %v1142 = vpop.f32.mrf.mxu0
        %1143 = vdwg.mxu0
        %v1144 = vadd.f32 %v1057, %v1141
        %1145 = vmatpush.bf16.msra.mxu0 0
        %1146 = vmatpush.bf16.msra.mxu0 0
        %1147 = vmatpush.bf16.msra.mxu0 0
        %1148 = vmatpush.bf16.msra.mxu0 0
        %1149 = vmatpush.bf16.msra.mxu0 0
        %1150 = vmatpush.bf16.msra.mxu0 0
        %1151 = vmatpush.bf16.msra.mxu0 0
        %1152 = vmatpush.bf16.msra.mxu0 %v1114
        %1153 = vmatmul.bf16.gmra.mxu0 %v1088
        %v1154 = vpop.f32.mrf.mxu0
        %v1155 = vadd.f32 0.0, %v1154
        %v1156 = vpop.f32.mrf.mxu0
        %1157 = vdwg.mxu0
        %v1158 = vadd.f32 %v1144, %v1155
        %1159 = vrot.lane.b32.xlu0 %v1046, 127
        %v1160 = vpop.permute.xlu0 %1159
        %v1161 = vsel %vm437, %v1160, 0.0
        %v1162 = vpack.c.bf16 %v1161, %v1161
        %v1164 = vsel %vm237, %v1162, 0
        %1166 = vmatpush.bf16.msra.mxu0 0
        %1167 = vmatpush.bf16.msra.mxu0 0
        %1168 = vmatpush.bf16.msra.mxu0 0
        %1169 = vmatpush.bf16.msra.mxu0 0
        %1170 = vmatpush.bf16.msra.mxu0 0
        %1171 = vmatpush.bf16.msra.mxu0 0
        %1172 = vmatpush.bf16.msra.mxu0 0
        %1173 = vmatpush.bf16.msra.mxu0 %v1164
        %1174 = vmatmul.bf16.gmra.mxu0 %v1111
        %v1175 = vpop.f32.mrf.mxu0
        %v1176 = vadd.f32 0.0, %v1175
        %v1177 = vpop.f32.mrf.mxu0
        %1178 = vdwg.mxu0
        %v1179 = vadd.f32 %v1158, %v1176
        %v1180 = vsel %vm223, %v1179, 0.0
        %v1181 = vadd.f32 %v887, %v1130
        %v1182 = vadd.f32 %v888, %v1180
        %1183 = vst [vmem:[%s205] sm:$0xff] %v1181
        %1184 = vst [vmem:[%s205 + $0x8] sm:$0xff] %v1182
        %s1185 = sand.u32 %s116, 1
        %s1186 = scalar_lea.sflag [#allocation4], %s1185
        %s1187 = sand.u32 %s116, 1
        %s1188 = smul.addr %s1187, 16
        %s1189 = scalar_lea.vmem [#allocation5], %s1188
        // Predicated region
        $region41: #{tpu_custom_call.1} parent=35 // pred_check
          %p1190 = pneg %p126
        $region42: #{tpu_custom_call.1} parent=35 // pred_check_branch
          %1192 = sbr.rel (%p1190) target = $region44
        $region43: #{tpu_custom_call.1} parent=35 // pred_region
          %1194 = vsyncadd %s1186, 0
          %s1195 = smul.addr %s19, 2
          %s1196 = smul.addr %s1195, 8
          %s1197 = scalar_lea.hbm %s4, %s1196
          %s1198 = sshll.u32 %s1189, 4
          %s1199 = int_to_ptr.vmem [resolvable:$true] %s1198
          %s1200 = sshll.u32 %s1197, 4
          %s1201 = int_to_ptr.hbm [resolvable:$true] %s1200
          %1206 = dma.vmem_to_hbm [thread:$0]  %s1199, 256, %s1201, %s1186, 128, 128, 8
        $region44: #{tpu_custom_call.1} parent=35 // pred_fallthru
          _
      $region36: #{tpu_custom_call.1} parent=5 // pred_fallthru
        _
      %p1207 = scmp.le.s32.totalorder 2, %s14
      // Predicated region
      $region45: #{tpu_custom_call.1} parent=5 // pred_check
        %p1208 = pneg %p1207
      $region46: #{tpu_custom_call.1} parent=5 // pred_check_branch
        %1210 = sbr.rel (%p1208) target = $region48
      $region47: #{tpu_custom_call.1} parent=5 // pred_region
        %s1211 = ssub.s32 %s14, 2
        // Predicated region
        $region49: #{tpu_custom_call.1} parent=47 // pred_check
          %p1212 = pneg %p132
        $region50: #{tpu_custom_call.1} parent=47 // pred_check_branch
          %1214 = sbr.rel (%p1212) target = $region52
        $region51: #{tpu_custom_call.1} parent=47 // pred_region
          %s1215 = sand.u32 %s117, 1
          %s1216 = scalar_lea.sflag [#allocation4], %s1215
          %s1217 = sand.u32 %s117, 1
          %s1218 = smul.addr %s1217, 16
          %s1219 = scalar_lea.vmem [#allocation5], %s1218
          %1221 = dma.done %s1216, 256
        $region52: #{tpu_custom_call.1} parent=47 // pred_fallthru
          _
      $region48: #{tpu_custom_call.1} parent=5 // pred_fallthru
        _
    $region6: #{tpu_custom_call.1} parent=1 // loop_footer
      %s18 = sadd.s32 1, %s14
    $region7: #{tpu_custom_call.1} parent=1 // loop_footer_branch
      %13 = sbr.rel target = $region3
    $region8: #{tpu_custom_call.1} parent=1 // loop_exit
      _
    %1222 = vsyncpa [#allocation3], 1
    %s1223 = scalar_lea.sflag [#allocation3], 1
    %1224 = vsyncpa %s1223, 1
    %1225 = vsyncpa [#allocation4], 1
    %s1226 = scalar_lea.sflag [#allocation4], 1
    %1227 = vsyncpa %s1226, 1

</llo_original>
